<compile_context>
chip_gen: v7x
topology: tpu7x:2x2x1
jax: 0.10.0
libtpu: 0.0.40
codegen_flags: <defaults>
</compile_context>

<pallas_src>
import functools

import jax
import jax.numpy as jnp
from jax.experimental import pallas as pl
from jax.experimental.pallas import tpu as pltpu


# ---------------------------------------------------------------------------
# In-kernel helpers (operate on jnp values in the merged (..., W*C) lane layout)
# ---------------------------------------------------------------------------
def _rotate_lanes(v, shift):
    """Circular shift of a (1, L) vector toward higher lane indices (static slices+concat)."""
    L = v.shape[-1]
    shift = shift % L
    if shift == 0:
        return v
    return jnp.concatenate([v[:, L - shift:], v[:, :L - shift]], axis=1)


def _channel_totals(v, n_groups, c):
    """v: (1, n_groups*c) per-lane totals in merged (w*c + ch) layout.
    Returns per-channel totals broadcast back onto the same layout:
      out[0, w*c + ch] = sum_w' v[0, w'*c + ch]."""
    total = v
    if n_groups & (n_groups - 1) == 0:                       # power of two: log-step tree
        shift = c
        while shift < n_groups * c:
            total = total + _rotate_lanes(total, shift)
            shift *= 2
    else:
        for t in range(1, n_groups):
            total = total + _rotate_lanes(v, t * c)
    return total


def _bn_merged(y2d, gamma_lane, beta_lane, *, n_groups, c, count, eps=1e-5):
    """Training-mode BatchNorm on (rows, n_groups*c), folded to a single FMA.
    One pass for sum / sum-of-squares; per-channel reduction via lane rotations."""
    s = jnp.sum(y2d, axis=0, keepdims=True)                  # (1, L) exact f32
    ss = jnp.sum(y2d * y2d, axis=0, keepdims=True)
    cs = _channel_totals(s, n_groups, c)
    css = _channel_totals(ss, n_groups, c)
    inv_n = 1.0 / float(count)
    mean = cs * inv_n
    var = css * inv_n - mean * mean                          # biased variance (PyTorch norm)
    scale = gamma_lane * jax.lax.rsqrt(var + eps)
    shift = beta_lane - mean * scale
    return y2d * scale + shift


def _pad_merged(y, p, c):
    """Zero-pad a (N, H, W*C) merged-layout value by p rows (top/bottom) and
    p*C lanes (left/right) using plain concatenations (no masked stores)."""
    if p == 0:
        return y
    n, h, wc = y.shape
    lane_pad = jnp.zeros((n, h, p * c), y.dtype)
    y = jnp.concatenate([lane_pad, y, lane_pad], axis=2)
    row_pad = jnp.zeros((n, p, wc + 2 * p * c), y.dtype)
    return jnp.concatenate([row_pad, y, row_pad], axis=1)


def _depthwise_merged(pad_ref, w_lane, K, stride, H_out, W_out, C):
    """Depthwise conv on a zero-padded VMEM scratch ref in merged layout.
    pad_ref: (N, Hp, Wp*C);  w_lane: (K*K, W_out*C) per-tap weights pre-tiled onto lanes.
    Returns (N, H_out, W_out*C) float32."""
    N = pad_ref.shape[0]
    L = W_out * C
    acc = jnp.zeros((N, H_out, L), jnp.float32)
    for i in range(K):
        if stride == 1:
            rows = pad_ref[:, i:i + H_out, :]                # one contiguous load per row i
        else:
            rows = pad_ref[:, i:i + (H_out - 1) * stride + 1, :][:, ::stride, :]
        for j in range(K):
            if stride == 1:
                slab = rows[:, :, j * C: j * C + L]          # static lane slice
            else:
                span = (W_out - 1) * stride + 1
                blk = rows[:, :, j * C:(j + span) * C]
                blk = blk.reshape(N, H_out, span, C)[:, :, ::stride, :]
                slab = blk.reshape(N, H_out, L)
            w = w_lane[i * K + j:i * K + j + 1, :].reshape(1, 1, L)
            acc = acc + slab * w
    return acc


# ---------------------------------------------------------------------------
# Pallas kernel: the full SepConv forward, fused
# ---------------------------------------------------------------------------
def sepconv_kernel(x_ref, dw1_ref, pw1_ref, g1_ref, b1_ref,
                   dw2_ref, pw2_ref, g2_ref, b2_ref,
                   o_ref, pad1_ref, pad2_ref,
                   *, kernel_size, stride, padding, c_in, c_out):
    K, s, p, C = kernel_size, stride, padding, c_in
    N, H, WC = x_ref.shape
    W = WC // C
    H1 = (H + 2 * p - K) // s + 1
    W1 = (W + 2 * p - K) // s + 1
    H2 = H1 + 2 * p - K + 1
    W2 = W1 + 2 * p - K + 1
    assert dw1_ref.shape == (K * K, W1 * C) and dw2_ref.shape == (K * K, W2 * C)
    assert pw1_ref.shape == (W1 * C, W1 * C) and pw2_ref.shape == (W2 * C, W2 * c_out)

    # -- ReLU + zero-pad the input into VMEM scratch (single aligned full-ref store) --
    pad1_ref[...] = _pad_merged(jnp.maximum(x_ref[...], 0.0), p, C)

    # -- depthwise conv 1 (stride s), merged-lane tap FMAs --
    y = _depthwise_merged(pad1_ref, dw1_ref[...], K, s, H1, W1, C)

    # -- 1x1 conv 1 as a block-diagonal (W1*C x W1*C) matmul: stays lane-merged --
    y = jnp.dot(y.reshape(N * H1, W1 * C), pw1_ref[...],
                preferred_element_type=jnp.float32)

    # -- BatchNorm 1 (training-mode batch stats) folded to one FMA, then ReLU --
    y = _bn_merged(y, g1_ref[...], b1_ref[...], n_groups=W1, c=C, count=N * H1 * W1)
    y = jnp.maximum(y, 0.0)

    # -- zero-pad the intermediate into the second VMEM scratch --
    pad2_ref[...] = _pad_merged(y.reshape(N, H1, W1 * C), p, C)

    # -- depthwise conv 2 (stride 1) --
    y = _depthwise_merged(pad2_ref, dw2_ref[...], K, 1, H2, W2, C)

    # -- 1x1 conv 2 (C -> C_out); output lanes = W2*C_out (lane-dense) --
    y = jnp.dot(y.reshape(N * H2, W2 * C), pw2_ref[...],
                preferred_element_type=jnp.float32)

    # -- BatchNorm 2 --
    y = _bn_merged(y, g2_ref[...], b2_ref[...], n_groups=W2, c=c_out, count=N * H2 * W2)

    o_ref[...] = y.astype(o_ref.dtype)


def _full_spec(shape):
    nd = len(shape)
    return pl.BlockSpec(shape, lambda i, _nd=nd: (0,) * _nd)


# ---------------------------------------------------------------------------
# Wrapper (NCHW in / NCHW out, like the PyTorch module)
# ---------------------------------------------------------------------------
def sepconv_pallas(x_nchw, params, *, kernel_size, stride, padding):
    dw1, pw1, g1, b1, dw2, pw2, g2, b2 = params
    k, s, p = kernel_size, stride, padding
    N, C, H, W = x_nchw.shape
    C_out = pw2.shape[1]
    H1 = (H + 2 * p - k) // s + 1
    W1 = (W + 2 * p - k) // s + 1
    H2 = H1 + 2 * p - k + 1
    W2 = W1 + 2 * p - k + 1
    f32 = jnp.float32

    # NCHW -> merged channels-last (N, H, W*C); padding is done in-kernel.
    xm = jnp.transpose(x_nchw, (0, 2, 3, 1)).reshape(N, H, W * C).astype(f32)

    # One-time weight/layout prep (tiny, lane-dense):
    #   depthwise weights tiled onto the merged (w*C + c) lane pattern,
    #   1x1 weights expanded to block-diagonal kron(I_W, pw),
    #   BN affine params tiled onto lanes.
    dw1_l = jnp.tile(dw1.astype(f32), (1, 1, W1)).reshape(k * k, W1 * C)
    dw2_l = jnp.tile(dw2.astype(f32), (1, 1, W2)).reshape(k * k, W2 * C)
    pw1_b = jnp.kron(jnp.eye(W1, dtype=f32), pw1.astype(f32))            # (W1*C, W1*C)
    pw2_b = jnp.kron(jnp.eye(W2, dtype=f32), pw2.astype(f32))            # (W2*C, W2*C_out)
    g1_l = jnp.tile(g1.reshape(1, C).astype(f32), (1, W1))
    b1_l = jnp.tile(b1.reshape(1, C).astype(f32), (1, W1))
    g2_l = jnp.tile(g2.reshape(1, C_out).astype(f32), (1, W2))
    b2_l = jnp.tile(b2.reshape(1, C_out).astype(f32), (1, W2))

    args = (xm, dw1_l, pw1_b, g1_l, b1_l, dw2_l, pw2_b, g2_l, b2_l)

    out2d = pl.pallas_call(
        functools.partial(sepconv_kernel, kernel_size=k, stride=s, padding=p,
                          c_in=C, c_out=C_out),
        out_shape=jax.ShapeDtypeStruct((N * H2, W2 * C_out), f32),
        grid=(1,),
        in_specs=[_full_spec(a.shape) for a in args],
        out_specs=_full_spec((N * H2, W2 * C_out)),
        scratch_shapes=[
            pltpu.VMEM((N, H + 2 * p, (W + 2 * p) * C), f32),     # padded ReLU(x)
            pltpu.VMEM((N, H1 + 2 * p, (W1 + 2 * p) * C), f32),   # padded mid activation
        ],
        compiler_params=pltpu.CompilerParams(
            dimension_semantics=("arbitrary",),
            vmem_limit_bytes=32 * 1024 * 1024,
        ),
    )(*args)

    # lane-dense (N*H2, W2*C_out) -> NCHW
    return jnp.transpose(out2d.reshape(N, H2, W2, C_out), (0, 3, 1, 2))


# ---------------------------------------------------------------------------
# Pure-JAX reference (for a sanity check)
# ---------------------------------------------------------------------------
def sepconv_ref(x_nchw, params, *, kernel_size, stride, padding):
    dw1, pw1, g1, b1, dw2, pw2, g2, b2 = params
    x = jnp.transpose(x_nchw, (0, 2, 3, 1)).astype(jnp.float32)

    def dwconv(z, w_kkc, s, p):
        C = z.shape[-1]
        w = w_kkc[:, :, None, :]   # HWIO, I=1, O=C
        return jax.lax.conv_general_dilated(
            z, w, window_strides=(s, s), padding=[(p, p), (p, p)],
            dimension_numbers=("NHWC", "HWIO", "NHWC"),
            feature_group_count=C)

    def pwconv(z, w_io):
        return jnp.einsum("nhwc,cd->nhwd", z, w_io)

    def bn(z, gamma, beta, eps=1e-5):
        m = jnp.mean(z, axis=(0, 1, 2))
        v = jnp.mean((z - m) ** 2, axis=(0, 1, 2))
        return (z - m) / jnp.sqrt(v + eps) * gamma.reshape(-1) + beta.reshape(-1)

    y = jax.nn.relu(x)
    y = dwconv(y, dw1, stride, padding)
    y = pwconv(y, pw1)
    y = bn(y, g1, b1)
    y = jax.nn.relu(y)
    y = dwconv(y, dw2, 1, padding)
    y = pwconv(y, pw2)
    y = bn(y, g2, b2)
    return jnp.transpose(y, (0, 3, 1, 2))


# ---------------------------------------------------------------------------
# Deterministic parameter init + smoke test
# ---------------------------------------------------------------------------
def init_params(key, C_in, C_out, kernel_size):
    ks = jax.random.split(key, 4)
    dw1 = 0.2 * jax.random.normal(ks[0], (kernel_size, kernel_size, C_in), jnp.float32)
    pw1 = 0.2 * jax.random.normal(ks[1], (C_in, C_in), jnp.float32)
    dw2 = 0.2 * jax.random.normal(ks[2], (kernel_size, kernel_size, C_in), jnp.float32)
    pw2 = 0.2 * jax.random.normal(ks[3], (C_in, C_out), jnp.float32)
    g1 = jnp.ones((C_in,), jnp.float32)
    b1 = jnp.zeros((C_in,), jnp.float32)
    g2 = jnp.ones((C_out,), jnp.float32)
    b2 = jnp.zeros((C_out,), jnp.float32)
    return (dw1, pw1, g1, b1, dw2, pw2, g2, b2)


if __name__ == "__main__":
    C_in, C_out = 4, 8
    kernel_size, stride, padding = 3, 1, 1
    N, H, W = 2, 16, 16

    key = jax.random.PRNGKey(0)
    kx, kp = jax.random.split(key)
    x = jax.random.normal(kx, (N, C_in, H, W), jnp.float32)
    params = init_params(kp, C_in, C_out, kernel_size)

    out = sepconv_pallas(x, params, kernel_size=kernel_size, stride=stride, padding=padding)
    out = jax.block_until_ready(out)

    ref = sepconv_ref(x, params, kernel_size=kernel_size, stride=stride, padding=padding)
    assert out.shape == ref.shape == (N, C_out, H, W), (out.shape, ref.shape)
    assert jnp.allclose(out, ref, rtol=5e-4, atol=5e-4), float(jnp.max(jnp.abs(out - ref)))

    print("KERNEL_OK")
</pallas_src>

<mosaic_0001>
module attributes {stable_mosaic.version = 11 : i64} {
  func.func @sepconv_kernel(%arg0: i32, %arg1: memref<2x16x64xf32, #tpu.memory_space<vmem>>, %arg2: memref<9x64xf32, #tpu.memory_space<vmem>>, %arg3: memref<64x64xf32, #tpu.memory_space<vmem>>, %arg4: memref<1x64xf32, #tpu.memory_space<vmem>>, %arg5: memref<1x64xf32, #tpu.memory_space<vmem>>, %arg6: memref<9x64xf32, #tpu.memory_space<vmem>>, %arg7: memref<64x128xf32, #tpu.memory_space<vmem>>, %arg8: memref<1x128xf32, #tpu.memory_space<vmem>>, %arg9: memref<1x128xf32, #tpu.memory_space<vmem>>, %arg10: memref<32x128xf32, #tpu.memory_space<vmem>>, %arg11: memref<2x18x72xf32, #tpu.memory_space<vmem>>, %arg12: memref<2x18x72xf32, #tpu.memory_space<vmem>>) attributes {dimension_semantics = [#tpu.dimension_semantics<arbitrary>], iteration_bounds = array<i64: 1>, scalar_prefetch = 0 : i64, scratch_operands = 2 : i64, tpu.core_type = #tpu.core_type<tc>, window_params = [{pipeline_mode = #tpu.pipeline_mode<synchronous>, transform_indices = @transform_0, window_bounds = array<i64: 2, 16, 64>}, {pipeline_mode = #tpu.pipeline_mode<synchronous>, transform_indices = @transform_1, window_bounds = array<i64: 9, 64>}, {pipeline_mode = #tpu.pipeline_mode<synchronous>, transform_indices = @transform_2, window_bounds = array<i64: 64, 64>}, {pipeline_mode = #tpu.pipeline_mode<synchronous>, transform_indices = @transform_3, window_bounds = array<i64: 1, 64>}, {pipeline_mode = #tpu.pipeline_mode<synchronous>, transform_indices = @transform_4, window_bounds = array<i64: 1, 64>}, {pipeline_mode = #tpu.pipeline_mode<synchronous>, transform_indices = @transform_5, window_bounds = array<i64: 9, 64>}, {pipeline_mode = #tpu.pipeline_mode<synchronous>, transform_indices = @transform_6, window_bounds = array<i64: 64, 128>}, {pipeline_mode = #tpu.pipeline_mode<synchronous>, transform_indices = @transform_7, window_bounds = array<i64: 1, 128>}, {pipeline_mode = #tpu.pipeline_mode<synchronous>, transform_indices = @transform_8, window_bounds = array<i64: 1, 128>}, {pipeline_mode = #tpu.pipeline_mode<synchronous>, transform_indices = @transform_9, window_bounds = array<i64: 32, 128>}]} {
    %c0 = arith.constant 0 : index
    %c0_0 = arith.constant 0 : index
    %c0_1 = arith.constant 0 : index
    %0 = vector.load %arg1[%c0, %c0_0, %c0_1] : memref<2x16x64xf32, #tpu.memory_space<vmem>>, vector<2x16x64xf32>
    %cst = arith.constant 0.000000e+00 : f32
    %1 = vector.broadcast %cst : f32 to vector<2x16x64xf32>
    %2 = arith.maximumf %0, %1 : vector<2x16x64xf32>
    %cst_2 = arith.constant 0.000000e+00 : f32
    %3 = vector.broadcast %cst_2 : f32 to vector<2x16x4xf32>
    %4 = tpu.concatenate %3, %2, %3 in 2 : vector<2x16x4xf32>, vector<2x16x64xf32>, vector<2x16x4xf32> -> vector<2x16x72xf32>
    %cst_3 = arith.constant 0.000000e+00 : f32
    %5 = vector.broadcast %cst_3 : f32 to vector<2x1x72xf32>
    %6 = tpu.concatenate %5, %4, %5 in 1 : vector<2x1x72xf32>, vector<2x16x72xf32>, vector<2x1x72xf32> -> vector<2x18x72xf32>
    %c0_4 = arith.constant 0 : index
    %c0_5 = arith.constant 0 : index
    %c0_6 = arith.constant 0 : index
    %7 = vector.load %arg11[%c0_4, %c0_5, %c0_6] : memref<2x18x72xf32, #tpu.memory_space<vmem>>, vector<2x18x72xf32>
    tpu.vector_store %arg11[%c0_4, %c0_5, %c0_6], %6 {strides = array<i32>} : memref<2x18x72xf32, #tpu.memory_space<vmem>>, vector<2x18x72xf32>,
    %c0_7 = arith.constant 0 : index
    %c0_8 = arith.constant 0 : index
    %8 = vector.load %arg2[%c0_7, %c0_8] : memref<9x64xf32, #tpu.memory_space<vmem>>, vector<9x64xf32>
    %cst_9 = arith.constant 0.000000e+00 : f32
    %9 = vector.broadcast %cst_9 : f32 to vector<2x16x64xf32>
    %c0_10 = arith.constant 0 : index
    %c0_11 = arith.constant 0 : index
    %c0_12 = arith.constant 0 : index
    %10 = vector.load %arg11[%c0_10, %c0_11, %c0_12] : memref<2x18x72xf32, #tpu.memory_space<vmem>>, vector<2x16x72xf32>
    %11 = vector.extract_strided_slice %10 {offsets = [0, 0, 0], sizes = [2, 16, 64], strides = [1, 1, 1]} : vector<2x16x72xf32> to vector<2x16x64xf32>
    %12 = vector.extract_strided_slice %8 {offsets = [0, 0], sizes = [1, 64], strides = [1, 1]} : vector<9x64xf32> to vector<1x64xf32>
    %13 = vector.shape_cast %12 : vector<1x64xf32> to vector<1x1x64xf32>
    %14 = vector.broadcast %13 : vector<1x1x64xf32> to vector<2x16x64xf32>
    %15 = arith.mulf %11, %14 : vector<2x16x64xf32>
    %16 = arith.addf %9, %15 : vector<2x16x64xf32>
    %17 = vector.extract_strided_slice %10 {offsets = [0, 0, 4], sizes = [2, 16, 64], strides = [1, 1, 1]} : vector<2x16x72xf32> to vector<2x16x64xf32>
    %18 = vector.extract_strided_slice %8 {offsets = [1, 0], sizes = [1, 64], strides = [1, 1]} : vector<9x64xf32> to vector<1x64xf32>
    %19 = vector.shape_cast %18 : vector<1x64xf32> to vector<1x1x64xf32>
    %20 = vector.broadcast %19 : vector<1x1x64xf32> to vector<2x16x64xf32>
    %21 = arith.mulf %17, %20 : vector<2x16x64xf32>
    %22 = arith.addf %16, %21 : vector<2x16x64xf32>
    %23 = vector.extract_strided_slice %10 {offsets = [0, 0, 8], sizes = [2, 16, 64], strides = [1, 1, 1]} : vector<2x16x72xf32> to vector<2x16x64xf32>
    %24 = vector.extract_strided_slice %8 {offsets = [2, 0], sizes = [1, 64], strides = [1, 1]} : vector<9x64xf32> to vector<1x64xf32>
    %25 = vector.shape_cast %24 : vector<1x64xf32> to vector<1x1x64xf32>
    %26 = vector.broadcast %25 : vector<1x1x64xf32> to vector<2x16x64xf32>
    %27 = arith.mulf %23, %26 : vector<2x16x64xf32>
    %28 = arith.addf %22, %27 : vector<2x16x64xf32>
    %c0_13 = arith.constant 0 : index
    %c1 = arith.constant 1 : index
    %c0_14 = arith.constant 0 : index
    %29 = vector.load %arg11[%c0_13, %c1, %c0_14] : memref<2x18x72xf32, #tpu.memory_space<vmem>>, vector<2x16x72xf32>
    %30 = vector.extract_strided_slice %29 {offsets = [0, 0, 0], sizes = [2, 16, 64], strides = [1, 1, 1]} : vector<2x16x72xf32> to vector<2x16x64xf32>
    %31 = vector.extract_strided_slice %8 {offsets = [3, 0], sizes = [1, 64], strides = [1, 1]} : vector<9x64xf32> to vector<1x64xf32>
    %32 = vector.shape_cast %31 : vector<1x64xf32> to vector<1x1x64xf32>
    %33 = vector.broadcast %32 : vector<1x1x64xf32> to vector<2x16x64xf32>
    %34 = arith.mulf %30, %33 : vector<2x16x64xf32>
    %35 = arith.addf %28, %34 : vector<2x16x64xf32>
    %36 = vector.extract_strided_slice %29 {offsets = [0, 0, 4], sizes = [2, 16, 64], strides = [1, 1, 1]} : vector<2x16x72xf32> to vector<2x16x64xf32>
    %37 = vector.extract_strided_slice %8 {offsets = [4, 0], sizes = [1, 64], strides = [1, 1]} : vector<9x64xf32> to vector<1x64xf32>
    %38 = vector.shape_cast %37 : vector<1x64xf32> to vector<1x1x64xf32>
    %39 = vector.broadcast %38 : vector<1x1x64xf32> to vector<2x16x64xf32>
    %40 = arith.mulf %36, %39 : vector<2x16x64xf32>
    %41 = arith.addf %35, %40 : vector<2x16x64xf32>
    %42 = vector.extract_strided_slice %29 {offsets = [0, 0, 8], sizes = [2, 16, 64], strides = [1, 1, 1]} : vector<2x16x72xf32> to vector<2x16x64xf32>
    %43 = vector.extract_strided_slice %8 {offsets = [5, 0], sizes = [1, 64], strides = [1, 1]} : vector<9x64xf32> to vector<1x64xf32>
    %44 = vector.shape_cast %43 : vector<1x64xf32> to vector<1x1x64xf32>
    %45 = vector.broadcast %44 : vector<1x1x64xf32> to vector<2x16x64xf32>
    %46 = arith.mulf %42, %45 : vector<2x16x64xf32>
    %47 = arith.addf %41, %46 : vector<2x16x64xf32>
    %c0_15 = arith.constant 0 : index
    %c2 = arith.constant 2 : index
    %c0_16 = arith.constant 0 : index
    %48 = vector.load %arg11[%c0_15, %c2, %c0_16] : memref<2x18x72xf32, #tpu.memory_space<vmem>>, vector<2x16x72xf32>
    %49 = vector.extract_strided_slice %48 {offsets = [0, 0, 0], sizes = [2, 16, 64], strides = [1, 1, 1]} : vector<2x16x72xf32> to vector<2x16x64xf32>
    %50 = vector.extract_strided_slice %8 {offsets = [6, 0], sizes = [1, 64], strides = [1, 1]} : vector<9x64xf32> to vector<1x64xf32>
    %51 = vector.shape_cast %50 : vector<1x64xf32> to vector<1x1x64xf32>
    %52 = vector.broadcast %51 : vector<1x1x64xf32> to vector<2x16x64xf32>
    %53 = arith.mulf %49, %52 : vector<2x16x64xf32>
    %54 = arith.addf %47, %53 : vector<2x16x64xf32>
    %55 = vector.extract_strided_slice %48 {offsets = [0, 0, 4], sizes = [2, 16, 64], strides = [1, 1, 1]} : vector<2x16x72xf32> to vector<2x16x64xf32>
    %56 = vector.extract_strided_slice %8 {offsets = [7, 0], sizes = [1, 64], strides = [1, 1]} : vector<9x64xf32> to vector<1x64xf32>
    %57 = vector.shape_cast %56 : vector<1x64xf32> to vector<1x1x64xf32>
    %58 = vector.broadcast %57 : vector<1x1x64xf32> to vector<2x16x64xf32>
    %59 = arith.mulf %55, %58 : vector<2x16x64xf32>
    %60 = arith.addf %54, %59 : vector<2x16x64xf32>
    %61 = vector.extract_strided_slice %48 {offsets = [0, 0, 8], sizes = [2, 16, 64], strides = [1, 1, 1]} : vector<2x16x72xf32> to vector<2x16x64xf32>
    %62 = vector.extract_strided_slice %8 {offsets = [8, 0], sizes = [1, 64], strides = [1, 1]} : vector<9x64xf32> to vector<1x64xf32>
    %63 = vector.shape_cast %62 : vector<1x64xf32> to vector<1x1x64xf32>
    %64 = vector.broadcast %63 : vector<1x1x64xf32> to vector<2x16x64xf32>
    %65 = arith.mulf %61, %64 : vector<2x16x64xf32>
    %66 = arith.addf %60, %65 : vector<2x16x64xf32>
    %67 = vector.shape_cast %66 : vector<2x16x64xf32> to vector<32x64xf32>
    %c0_17 = arith.constant 0 : index
    %c0_18 = arith.constant 0 : index
    %68 = vector.load %arg3[%c0_17, %c0_18] : memref<64x64xf32, #tpu.memory_space<vmem>>, vector<64x64xf32>
    %cst_19 = arith.constant dense<0.000000e+00> : vector<32x64xf32>
    %69 = tpu.matmul %67, %68, %cst_19 {dimension_numbers = #tpu.dot_dimension_numbers<[1], [0], [0], [1], [0, 0, 1, 1], [], []>} : vector<32x64xf32>, vector<64x64xf32>, vector<32x64xf32> -> vector<32x64xf32>
    %c0_20 = arith.constant 0 : index
    %c0_21 = arith.constant 0 : index
    %70 = vector.load %arg4[%c0_20, %c0_21] : memref<1x64xf32, #tpu.memory_space<vmem>>, vector<1x64xf32>
    %c0_22 = arith.constant 0 : index
    %c0_23 = arith.constant 0 : index
    %71 = vector.load %arg5[%c0_22, %c0_23] : memref<1x64xf32, #tpu.memory_space<vmem>>, vector<1x64xf32>
    %cst_24 = arith.constant dense<0.000000e+00> : vector<64xf32>
    %72 = vector.multi_reduction <add>, %69, %cst_24 [0] : vector<32x64xf32> to vector<64xf32>
    %73 = vector.shape_cast %72 : vector<64xf32> to vector<1x64xf32>
    %74 = arith.mulf %69, %69 : vector<32x64xf32>
    %cst_25 = arith.constant dense<0.000000e+00> : vector<64xf32>
    %75 = vector.multi_reduction <add>, %74, %cst_25 [0] : vector<32x64xf32> to vector<64xf32>
    %76 = vector.shape_cast %75 : vector<64xf32> to vector<1x64xf32>
    %77 = vector.extract_strided_slice %73 {offsets = [0, 60], sizes = [1, 4], strides = [1, 1]} : vector<1x64xf32> to vector<1x4xf32>
    %78 = vector.extract_strided_slice %73 {offsets = [0, 0], sizes = [1, 60], strides = [1, 1]} : vector<1x64xf32> to vector<1x60xf32>
    %79 = tpu.concatenate %77, %78 in 1 : vector<1x4xf32>, vector<1x60xf32> -> vector<1x64xf32>
    %80 = arith.addf %73, %79 : vector<1x64xf32>
    %81 = vector.extract_strided_slice %80 {offsets = [0, 56], sizes = [1, 8], strides = [1, 1]} : vector<1x64xf32> to vector<1x8xf32>
    %82 = vector.extract_strided_slice %80 {offsets = [0, 0], sizes = [1, 56], strides = [1, 1]} : vector<1x64xf32> to vector<1x56xf32>
    %83 = tpu.concatenate %81, %82 in 1 : vector<1x8xf32>, vector<1x56xf32> -> vector<1x64xf32>
    %84 = arith.addf %80, %83 : vector<1x64xf32>
    %85 = vector.extract_strided_slice %84 {offsets = [0, 48], sizes = [1, 16], strides = [1, 1]} : vector<1x64xf32> to vector<1x16xf32>
    %86 = vector.extract_strided_slice %84 {offsets = [0, 0], sizes = [1, 48], strides = [1, 1]} : vector<1x64xf32> to vector<1x48xf32>
    %87 = tpu.concatenate %85, %86 in 1 : vector<1x16xf32>, vector<1x48xf32> -> vector<1x64xf32>
    %88 = arith.addf %84, %87 : vector<1x64xf32>
    %89 = vector.extract_strided_slice %88 {offsets = [0, 32], sizes = [1, 32], strides = [1, 1]} : vector<1x64xf32> to vector<1x32xf32>
    %90 = vector.extract_strided_slice %88 {offsets = [0, 0], sizes = [1, 32], strides = [1, 1]} : vector<1x64xf32> to vector<1x32xf32>
    %91 = tpu.concatenate %89, %90 in 1 : vector<1x32xf32>, vector<1x32xf32> -> vector<1x64xf32>
    %92 = arith.addf %88, %91 : vector<1x64xf32>
    %93 = vector.extract_strided_slice %76 {offsets = [0, 60], sizes = [1, 4], strides = [1, 1]} : vector<1x64xf32> to vector<1x4xf32>
    %94 = vector.extract_strided_slice %76 {offsets = [0, 0], sizes = [1, 60], strides = [1, 1]} : vector<1x64xf32> to vector<1x60xf32>
    %95 = tpu.concatenate %93, %94 in 1 : vector<1x4xf32>, vector<1x60xf32> -> vector<1x64xf32>
    %96 = arith.addf %76, %95 : vector<1x64xf32>
    %97 = vector.extract_strided_slice %96 {offsets = [0, 56], sizes = [1, 8], strides = [1, 1]} : vector<1x64xf32> to vector<1x8xf32>
    %98 = vector.extract_strided_slice %96 {offsets = [0, 0], sizes = [1, 56], strides = [1, 1]} : vector<1x64xf32> to vector<1x56xf32>
    %99 = tpu.concatenate %97, %98 in 1 : vector<1x8xf32>, vector<1x56xf32> -> vector<1x64xf32>
    %100 = arith.addf %96, %99 : vector<1x64xf32>
    %101 = vector.extract_strided_slice %100 {offsets = [0, 48], sizes = [1, 16], strides = [1, 1]} : vector<1x64xf32> to vector<1x16xf32>
    %102 = vector.extract_strided_slice %100 {offsets = [0, 0], sizes = [1, 48], strides = [1, 1]} : vector<1x64xf32> to vector<1x48xf32>
    %103 = tpu.concatenate %101, %102 in 1 : vector<1x16xf32>, vector<1x48xf32> -> vector<1x64xf32>
    %104 = arith.addf %100, %103 : vector<1x64xf32>
    %105 = vector.extract_strided_slice %104 {offsets = [0, 32], sizes = [1, 32], strides = [1, 1]} : vector<1x64xf32> to vector<1x32xf32>
    %106 = vector.extract_strided_slice %104 {offsets = [0, 0], sizes = [1, 32], strides = [1, 1]} : vector<1x64xf32> to vector<1x32xf32>
    %107 = tpu.concatenate %105, %106 in 1 : vector<1x32xf32>, vector<1x32xf32> -> vector<1x64xf32>
    %108 = arith.addf %104, %107 : vector<1x64xf32>
    %cst_26 = arith.constant 0.001953125 : f32
    %109 = vector.broadcast %cst_26 : f32 to vector<1x64xf32>
    %110 = arith.mulf %92, %109 : vector<1x64xf32>
    %cst_27 = arith.constant 0.001953125 : f32
    %111 = vector.broadcast %cst_27 : f32 to vector<1x64xf32>
    %112 = arith.mulf %108, %111 : vector<1x64xf32>
    %113 = arith.mulf %110, %110 : vector<1x64xf32>
    %114 = arith.subf %112, %113 : vector<1x64xf32>
    %cst_28 = arith.constant 9.99999974E-6 : f32
    %115 = vector.broadcast %cst_28 : f32 to vector<1x64xf32>
    %116 = arith.addf %114, %115 : vector<1x64xf32>
    %117 = math.rsqrt %116 : vector<1x64xf32>
    %118 = arith.mulf %70, %117 : vector<1x64xf32>
    %119 = arith.mulf %110, %118 : vector<1x64xf32>
    %120 = arith.subf %71, %119 : vector<1x64xf32>
    %121 = vector.broadcast %118 : vector<1x64xf32> to vector<32x64xf32>
    %122 = arith.mulf %69, %121 : vector<32x64xf32>
    %123 = vector.broadcast %120 : vector<1x64xf32> to vector<32x64xf32>
    %124 = arith.addf %122, %123 : vector<32x64xf32>
    %cst_29 = arith.constant 0.000000e+00 : f32
    %125 = vector.broadcast %cst_29 : f32 to vector<32x64xf32>
    %126 = arith.maximumf %124, %125 : vector<32x64xf32>
    %127 = vector.shape_cast %126 : vector<32x64xf32> to vector<2x16x64xf32>
    %cst_30 = arith.constant 0.000000e+00 : f32
    %128 = vector.broadcast %cst_30 : f32 to vector<2x16x4xf32>
    %129 = tpu.concatenate %128, %127, %128 in 2 : vector<2x16x4xf32>, vector<2x16x64xf32>, vector<2x16x4xf32> -> vector<2x16x72xf32>
    %cst_31 = arith.constant 0.000000e+00 : f32
    %130 = vector.broadcast %cst_31 : f32 to vector<2x1x72xf32>
    %131 = tpu.concatenate %130, %129, %130 in 1 : vector<2x1x72xf32>, vector<2x16x72xf32>, vector<2x1x72xf32> -> vector<2x18x72xf32>
    %c0_32 = arith.constant 0 : index
    %c0_33 = arith.constant 0 : index
    %c0_34 = arith.constant 0 : index
    %132 = vector.load %arg12[%c0_32, %c0_33, %c0_34] : memref<2x18x72xf32, #tpu.memory_space<vmem>>, vector<2x18x72xf32>
    tpu.vector_store %arg12[%c0_32, %c0_33, %c0_34], %131 {strides = array<i32>} : memref<2x18x72xf32, #tpu.memory_space<vmem>>, vector<2x18x72xf32>,
    %c0_35 = arith.constant 0 : index
    %c0_36 = arith.constant 0 : index
    %133 = vector.load %arg6[%c0_35, %c0_36] : memref<9x64xf32, #tpu.memory_space<vmem>>, vector<9x64xf32>
    %cst_37 = arith.constant 0.000000e+00 : f32
    %134 = vector.broadcast %cst_37 : f32 to vector<2x16x64xf32>
    %c0_38 = arith.constant 0 : index
    %c0_39 = arith.constant 0 : index
    %c0_40 = arith.constant 0 : index
    %135 = vector.load %arg12[%c0_38, %c0_39, %c0_40] : memref<2x18x72xf32, #tpu.memory_space<vmem>>, vector<2x16x72xf32>
    %136 = vector.extract_strided_slice %135 {offsets = [0, 0, 0], sizes = [2, 16, 64], strides = [1, 1, 1]} : vector<2x16x72xf32> to vector<2x16x64xf32>
    %137 = vector.extract_strided_slice %133 {offsets = [0, 0], sizes = [1, 64], strides = [1, 1]} : vector<9x64xf32> to vector<1x64xf32>
    %138 = vector.shape_cast %137 : vector<1x64xf32> to vector<1x1x64xf32>
    %139 = vector.broadcast %138 : vector<1x1x64xf32> to vector<2x16x64xf32>
    %140 = arith.mulf %136, %139 : vector<2x16x64xf32>
    %141 = arith.addf %134, %140 : vector<2x16x64xf32>
    %142 = vector.extract_strided_slice %135 {offsets = [0, 0, 4], sizes = [2, 16, 64], strides = [1, 1, 1]} : vector<2x16x72xf32> to vector<2x16x64xf32>
    %143 = vector.extract_strided_slice %133 {offsets = [1, 0], sizes = [1, 64], strides = [1, 1]} : vector<9x64xf32> to vector<1x64xf32>
    %144 = vector.shape_cast %143 : vector<1x64xf32> to vector<1x1x64xf32>
    %145 = vector.broadcast %144 : vector<1x1x64xf32> to vector<2x16x64xf32>
    %146 = arith.mulf %142, %145 : vector<2x16x64xf32>
    %147 = arith.addf %141, %146 : vector<2x16x64xf32>
    %148 = vector.extract_strided_slice %135 {offsets = [0, 0, 8], sizes = [2, 16, 64], strides = [1, 1, 1]} : vector<2x16x72xf32> to vector<2x16x64xf32>
    %149 = vector.extract_strided_slice %133 {offsets = [2, 0], sizes = [1, 64], strides = [1, 1]} : vector<9x64xf32> to vector<1x64xf32>
    %150 = vector.shape_cast %149 : vector<1x64xf32> to vector<1x1x64xf32>
    %151 = vector.broadcast %150 : vector<1x1x64xf32> to vector<2x16x64xf32>
    %152 = arith.mulf %148, %151 : vector<2x16x64xf32>
    %153 = arith.addf %147, %152 : vector<2x16x64xf32>
    %c0_41 = arith.constant 0 : index
    %c1_42 = arith.constant 1 : index
    %c0_43 = arith.constant 0 : index
    %154 = vector.load %arg12[%c0_41, %c1_42, %c0_43] : memref<2x18x72xf32, #tpu.memory_space<vmem>>, vector<2x16x72xf32>
    %155 = vector.extract_strided_slice %154 {offsets = [0, 0, 0], sizes = [2, 16, 64], strides = [1, 1, 1]} : vector<2x16x72xf32> to vector<2x16x64xf32>
    %156 = vector.extract_strided_slice %133 {offsets = [3, 0], sizes = [1, 64], strides = [1, 1]} : vector<9x64xf32> to vector<1x64xf32>
    %157 = vector.shape_cast %156 : vector<1x64xf32> to vector<1x1x64xf32>
    %158 = vector.broadcast %157 : vector<1x1x64xf32> to vector<2x16x64xf32>
    %159 = arith.mulf %155, %158 : vector<2x16x64xf32>
    %160 = arith.addf %153, %159 : vector<2x16x64xf32>
    %161 = vector.extract_strided_slice %154 {offsets = [0, 0, 4], sizes = [2, 16, 64], strides = [1, 1, 1]} : vector<2x16x72xf32> to vector<2x16x64xf32>
    %162 = vector.extract_strided_slice %133 {offsets = [4, 0], sizes = [1, 64], strides = [1, 1]} : vector<9x64xf32> to vector<1x64xf32>
    %163 = vector.shape_cast %162 : vector<1x64xf32> to vector<1x1x64xf32>
    %164 = vector.broadcast %163 : vector<1x1x64xf32> to vector<2x16x64xf32>
    %165 = arith.mulf %161, %164 : vector<2x16x64xf32>
    %166 = arith.addf %160, %165 : vector<2x16x64xf32>
    %167 = vector.extract_strided_slice %154 {offsets = [0, 0, 8], sizes = [2, 16, 64], strides = [1, 1, 1]} : vector<2x16x72xf32> to vector<2x16x64xf32>
    %168 = vector.extract_strided_slice %133 {offsets = [5, 0], sizes = [1, 64], strides = [1, 1]} : vector<9x64xf32> to vector<1x64xf32>
    %169 = vector.shape_cast %168 : vector<1x64xf32> to vector<1x1x64xf32>
    %170 = vector.broadcast %169 : vector<1x1x64xf32> to vector<2x16x64xf32>
    %171 = arith.mulf %167, %170 : vector<2x16x64xf32>
    %172 = arith.addf %166, %171 : vector<2x16x64xf32>
    %c0_44 = arith.constant 0 : index
    %c2_45 = arith.constant 2 : index
    %c0_46 = arith.constant 0 : index
    %173 = vector.load %arg12[%c0_44, %c2_45, %c0_46] : memref<2x18x72xf32, #tpu.memory_space<vmem>>, vector<2x16x72xf32>
    %174 = vector.extract_strided_slice %173 {offsets = [0, 0, 0], sizes = [2, 16, 64], strides = [1, 1, 1]} : vector<2x16x72xf32> to vector<2x16x64xf32>
    %175 = vector.extract_strided_slice %133 {offsets = [6, 0], sizes = [1, 64], strides = [1, 1]} : vector<9x64xf32> to vector<1x64xf32>
    %176 = vector.shape_cast %175 : vector<1x64xf32> to vector<1x1x64xf32>
    %177 = vector.broadcast %176 : vector<1x1x64xf32> to vector<2x16x64xf32>
    %178 = arith.mulf %174, %177 : vector<2x16x64xf32>
    %179 = arith.addf %172, %178 : vector<2x16x64xf32>
    %180 = vector.extract_strided_slice %173 {offsets = [0, 0, 4], sizes = [2, 16, 64], strides = [1, 1, 1]} : vector<2x16x72xf32> to vector<2x16x64xf32>
    %181 = vector.extract_strided_slice %133 {offsets = [7, 0], sizes = [1, 64], strides = [1, 1]} : vector<9x64xf32> to vector<1x64xf32>
    %182 = vector.shape_cast %181 : vector<1x64xf32> to vector<1x1x64xf32>
    %183 = vector.broadcast %182 : vector<1x1x64xf32> to vector<2x16x64xf32>
    %184 = arith.mulf %180, %183 : vector<2x16x64xf32>
    %185 = arith.addf %179, %184 : vector<2x16x64xf32>
    %186 = vector.extract_strided_slice %173 {offsets = [0, 0, 8], sizes = [2, 16, 64], strides = [1, 1, 1]} : vector<2x16x72xf32> to vector<2x16x64xf32>
    %187 = vector.extract_strided_slice %133 {offsets = [8, 0], sizes = [1, 64], strides = [1, 1]} : vector<9x64xf32> to vector<1x64xf32>
    %188 = vector.shape_cast %187 : vector<1x64xf32> to vector<1x1x64xf32>
    %189 = vector.broadcast %188 : vector<1x1x64xf32> to vector<2x16x64xf32>
    %190 = arith.mulf %186, %189 : vector<2x16x64xf32>
    %191 = arith.addf %185, %190 : vector<2x16x64xf32>
    %192 = vector.shape_cast %191 : vector<2x16x64xf32> to vector<32x64xf32>
    %c0_47 = arith.constant 0 : index
    %c0_48 = arith.constant 0 : index
    %193 = vector.load %arg7[%c0_47, %c0_48] : memref<64x128xf32, #tpu.memory_space<vmem>>, vector<64x128xf32>
    %cst_49 = arith.constant dense<0.000000e+00> : vector<32x128xf32>
    %194 = tpu.matmul %192, %193, %cst_49 {dimension_numbers = #tpu.dot_dimension_numbers<[1], [0], [0], [1], [0, 0, 1, 1], [], []>} : vector<32x64xf32>, vector<64x128xf32>, vector<32x128xf32> -> vector<32x128xf32>
    %c0_50 = arith.constant 0 : index
    %c0_51 = arith.constant 0 : index
    %195 = vector.load %arg8[%c0_50, %c0_51] : memref<1x128xf32, #tpu.memory_space<vmem>>, vector<1x128xf32>
    %c0_52 = arith.constant 0 : index
    %c0_53 = arith.constant 0 : index
    %196 = vector.load %arg9[%c0_52, %c0_53] : memref<1x128xf32, #tpu.memory_space<vmem>>, vector<1x128xf32>
    %cst_54 = arith.constant dense<0.000000e+00> : vector<128xf32>
    %197 = vector.multi_reduction <add>, %194, %cst_54 [0] : vector<32x128xf32> to vector<128xf32>
    %198 = vector.shape_cast %197 : vector<128xf32> to vector<1x128xf32>
    %199 = arith.mulf %194, %194 : vector<32x128xf32>
    %cst_55 = arith.constant dense<0.000000e+00> : vector<128xf32>
    %200 = vector.multi_reduction <add>, %199, %cst_55 [0] : vector<32x128xf32> to vector<128xf32>
    %201 = vector.shape_cast %200 : vector<128xf32> to vector<1x128xf32>
    %202 = vector.extract_strided_slice %198 {offsets = [0, 120], sizes = [1, 8], strides = [1, 1]} : vector<1x128xf32> to vector<1x8xf32>
    %203 = vector.extract_strided_slice %198 {offsets = [0, 0], sizes = [1, 120], strides = [1, 1]} : vector<1x128xf32> to vector<1x120xf32>
    %204 = tpu.concatenate %202, %203 in 1 : vector<1x8xf32>, vector<1x120xf32> -> vector<1x128xf32>
    %205 = arith.addf %198, %204 : vector<1x128xf32>
    %206 = vector.extract_strided_slice %205 {offsets = [0, 112], sizes = [1, 16], strides = [1, 1]} : vector<1x128xf32> to vector<1x16xf32>
    %207 = vector.extract_strided_slice %205 {offsets = [0, 0], sizes = [1, 112], strides = [1, 1]} : vector<1x128xf32> to vector<1x112xf32>
    %208 = tpu.concatenate %206, %207 in 1 : vector<1x16xf32>, vector<1x112xf32> -> vector<1x128xf32>
    %209 = arith.addf %205, %208 : vector<1x128xf32>
    %210 = vector.extract_strided_slice %209 {offsets = [0, 96], sizes = [1, 32], strides = [1, 1]} : vector<1x128xf32> to vector<1x32xf32>
    %211 = vector.extract_strided_slice %209 {offsets = [0, 0], sizes = [1, 96], strides = [1, 1]} : vector<1x128xf32> to vector<1x96xf32>
    %212 = tpu.concatenate %210, %211 in 1 : vector<1x32xf32>, vector<1x96xf32> -> vector<1x128xf32>
    %213 = arith.addf %209, %212 : vector<1x128xf32>
    %214 = vector.extract_strided_slice %213 {offsets = [0, 64], sizes = [1, 64], strides = [1, 1]} : vector<1x128xf32> to vector<1x64xf32>
    %215 = vector.extract_strided_slice %213 {offsets = [0, 0], sizes = [1, 64], strides = [1, 1]} : vector<1x128xf32> to vector<1x64xf32>
    %216 = tpu.concatenate %214, %215 in 1 : vector<1x64xf32>, vector<1x64xf32> -> vector<1x128xf32>
    %217 = arith.addf %213, %216 : vector<1x128xf32>
    %218 = vector.extract_strided_slice %201 {offsets = [0, 120], sizes = [1, 8], strides = [1, 1]} : vector<1x128xf32> to vector<1x8xf32>
    %219 = vector.extract_strided_slice %201 {offsets = [0, 0], sizes = [1, 120], strides = [1, 1]} : vector<1x128xf32> to vector<1x120xf32>
    %220 = tpu.concatenate %218, %219 in 1 : vector<1x8xf32>, vector<1x120xf32> -> vector<1x128xf32>
    %221 = arith.addf %201, %220 : vector<1x128xf32>
    %222 = vector.extract_strided_slice %221 {offsets = [0, 112], sizes = [1, 16], strides = [1, 1]} : vector<1x128xf32> to vector<1x16xf32>
    %223 = vector.extract_strided_slice %221 {offsets = [0, 0], sizes = [1, 112], strides = [1, 1]} : vector<1x128xf32> to vector<1x112xf32>
    %224 = tpu.concatenate %222, %223 in 1 : vector<1x16xf32>, vector<1x112xf32> -> vector<1x128xf32>
    %225 = arith.addf %221, %224 : vector<1x128xf32>
    %226 = vector.extract_strided_slice %225 {offsets = [0, 96], sizes = [1, 32], strides = [1, 1]} : vector<1x128xf32> to vector<1x32xf32>
    %227 = vector.extract_strided_slice %225 {offsets = [0, 0], sizes = [1, 96], strides = [1, 1]} : vector<1x128xf32> to vector<1x96xf32>
    %228 = tpu.concatenate %226, %227 in 1 : vector<1x32xf32>, vector<1x96xf32> -> vector<1x128xf32>
    %229 = arith.addf %225, %228 : vector<1x128xf32>
    %230 = vector.extract_strided_slice %229 {offsets = [0, 64], sizes = [1, 64], strides = [1, 1]} : vector<1x128xf32> to vector<1x64xf32>
    %231 = vector.extract_strided_slice %229 {offsets = [0, 0], sizes = [1, 64], strides = [1, 1]} : vector<1x128xf32> to vector<1x64xf32>
    %232 = tpu.concatenate %230, %231 in 1 : vector<1x64xf32>, vector<1x64xf32> -> vector<1x128xf32>
    %233 = arith.addf %229, %232 : vector<1x128xf32>
    %cst_56 = arith.constant 0.001953125 : f32
    %234 = vector.broadcast %cst_56 : f32 to vector<1x128xf32>
    %235 = arith.mulf %217, %234 : vector<1x128xf32>
    %cst_57 = arith.constant 0.001953125 : f32
    %236 = vector.broadcast %cst_57 : f32 to vector<1x128xf32>
    %237 = arith.mulf %233, %236 : vector<1x128xf32>
    %238 = arith.mulf %235, %235 : vector<1x128xf32>
    %239 = arith.subf %237, %238 : vector<1x128xf32>
    %cst_58 = arith.constant 9.99999974E-6 : f32
    %240 = vector.broadcast %cst_58 : f32 to vector<1x128xf32>
    %241 = arith.addf %239, %240 : vector<1x128xf32>
    %242 = math.rsqrt %241 : vector<1x128xf32>
    %243 = arith.mulf %195, %242 : vector<1x128xf32>
    %244 = arith.mulf %235, %243 : vector<1x128xf32>
    %245 = arith.subf %196, %244 : vector<1x128xf32>
    %246 = vector.broadcast %243 : vector<1x128xf32> to vector<32x128xf32>
    %247 = arith.mulf %194, %246 : vector<32x128xf32>
    %248 = vector.broadcast %245 : vector<1x128xf32> to vector<32x128xf32>
    %249 = arith.addf %247, %248 : vector<32x128xf32>
    %c0_59 = arith.constant 0 : index
    %c0_60 = arith.constant 0 : index
    %250 = vector.load %arg10[%c0_59, %c0_60] : memref<32x128xf32, #tpu.memory_space<vmem>>, vector<32x128xf32>
    tpu.vector_store %arg10[%c0_59, %c0_60], %249 {strides = array<i32>} : memref<32x128xf32, #tpu.memory_space<vmem>>, vector<32x128xf32>,
    return
  }
  func.func @transform_0(%arg0: i32) -> (i32, i32, i32) {
    %c0_i32 = arith.constant 0 : i32
    %c0_i32_0 = arith.constant 0 : i32
    %c0_i32_1 = arith.constant 0 : i32
    %c0_i32_2 = arith.constant 0 : i32
    return %c0_i32, %c0_i32_0, %c0_i32_1 : i32, i32, i32
  }
  func.func @transform_1(%arg0: i32) -> (i32, i32) {
    %c0_i32 = arith.constant 0 : i32
    %c0_i32_0 = arith.constant 0 : i32
    %c0_i32_1 = arith.constant 0 : i32
    return %c0_i32, %c0_i32_0 : i32, i32
  }
  func.func @transform_2(%arg0: i32) -> (i32, i32) {
    %c0_i32 = arith.constant 0 : i32
    %c0_i32_0 = arith.constant 0 : i32
    %c0_i32_1 = arith.constant 0 : i32
    return %c0_i32, %c0_i32_0 : i32, i32
  }
  func.func @transform_3(%arg0: i32) -> (i32, i32) {
    %c0_i32 = arith.constant 0 : i32
    %c0_i32_0 = arith.constant 0 : i32
    %c0_i32_1 = arith.constant 0 : i32
    return %c0_i32, %c0_i32_0 : i32, i32
  }
  func.func @transform_4(%arg0: i32) -> (i32, i32) {
    %c0_i32 = arith.constant 0 : i32
    %c0_i32_0 = arith.constant 0 : i32
    %c0_i32_1 = arith.constant 0 : i32
    return %c0_i32, %c0_i32_0 : i32, i32
  }
  func.func @transform_5(%arg0: i32) -> (i32, i32) {
    %c0_i32 = arith.constant 0 : i32
    %c0_i32_0 = arith.constant 0 : i32
    %c0_i32_1 = arith.constant 0 : i32
    return %c0_i32, %c0_i32_0 : i32, i32
  }
  func.func @transform_6(%arg0: i32) -> (i32, i32) {
    %c0_i32 = arith.constant 0 : i32
    %c0_i32_0 = arith.constant 0 : i32
    %c0_i32_1 = arith.constant 0 : i32
    return %c0_i32, %c0_i32_0 : i32, i32
  }
  func.func @transform_7(%arg0: i32) -> (i32, i32) {
    %c0_i32 = arith.constant 0 : i32
    %c0_i32_0 = arith.constant 0 : i32
    %c0_i32_1 = arith.constant 0 : i32
    return %c0_i32, %c0_i32_0 : i32, i32
  }
  func.func @transform_8(%arg0: i32) -> (i32, i32) {
    %c0_i32 = arith.constant 0 : i32
    %c0_i32_0 = arith.constant 0 : i32
    %c0_i32_1 = arith.constant 0 : i32
    return %c0_i32, %c0_i32_0 : i32, i32
  }
  func.func @transform_9(%arg0: i32) -> (i32, i32) {
    %c0_i32 = arith.constant 0 : i32
    %c0_i32_0 = arith.constant 0 : i32
    %c0_i32_1 = arith.constant 0 : i32
    return %c0_i32, %c0_i32_0 : i32, i32
  }
}

</mosaic_0001>

<llo_original>
// kernel: tpu_custom_call.1
$region0: #{tpu_custom_call.1}
  #allocation0 [shape = 'u32[]', space=smem, size = 0x4, offset = 0x4, fixed_abs, tag = 'smem constant byte address 0x4 - core index']
  #allocation1 [shape = 'u32[144,128]{1,0:T(1,128)}', space=vmem, size = 0x12000, scoped, tag = 'internal scratch']
  #allocation2 [shape = 'f32[2,18,72]{2,1,0:T(8,128)}', space=vmem, size = 0x6000, scoped, tag = 'scratch operand']
  #allocation3 [shape = 'f32[2,18,72]{2,1,0:T(8,128)}', space=vmem, size = 0x6000, scoped, tag = 'scratch operand']
  %s0 = inlined_call_operand.hbm [shape: f32[2,16,64], index: 0, kind: input, shape index: {}]
  %s1 = inlined_call_operand.hbm [shape: f32[9,64], index: 1, kind: input, shape index: {}]
  %s2 = inlined_call_operand.hbm [shape: f32[64,64], index: 2, kind: input, shape index: {}]
  %s3 = inlined_call_operand.vmem [shape: f32[1,64], index: 3, kind: input, shape index: {}]
  %s4 = inlined_call_operand.vmem [shape: f32[1,64], index: 4, kind: input, shape index: {}]
  %s5 = inlined_call_operand.vmem [shape: f32[9,64], index: 5, kind: input, shape index: {}]
  %s6 = inlined_call_operand.hbm [shape: f32[64,128], index: 6, kind: input, shape index: {}]
  %s7 = inlined_call_operand.vmem [shape: f32[1,128], index: 7, kind: input, shape index: {}]
  %s8 = inlined_call_operand.vmem [shape: f32[1,128], index: 8, kind: input, shape index: {}]
  %s9 = inlined_call_operand.hbm [shape: f32[32,128], index: 9, kind: output, shape index: {}]
  %s10 = sld [smem:[#allocation0]]
  $region62: #{tpu_custom_call.1} parent=0
    _
  %s12 = ssub.s32 1, %s10
  %s13 = scalar_select 0, %s12, %s10
  $region1: #{tpu_custom_call.1} parent=0
    #allocation4 [shape = 'u8[16384]{0}', space=vmem, size = 0x4000, scoped, tag = 'input window, operand 0, single buffered']
    #allocation5 [shape = 's32[1]{0}', space=sflag, size = 0x4, scoped, tag = 'scoped memory for tpu_custom_call.1']
    #allocation6 [shape = 's32[1]{0}', space=sflag, size = 0x4, scoped, tag = 'scoped memory for tpu_custom_call.1']
    #allocation7 [shape = 'u8[8192]{0}', space=vmem, size = 0x2000, scoped, tag = 'input window, operand 1, single buffered']
    #allocation8 [shape = 's32[1]{0}', space=sflag, size = 0x4, scoped, tag = 'scoped memory for tpu_custom_call.1']
    #allocation9 [shape = 'u8[32768]{0}', space=vmem, size = 0x8000, scoped, tag = 'input window, operand 2, single buffered']
    #allocation10 [shape = 'u8[32768]{0}', space=vmem, size = 0x8000, scoped, tag = 'input window, operand 6, single buffered']
    #allocation11 [shape = 's32[1]{0}', space=sflag, size = 0x4, scoped, tag = 'scoped memory for tpu_custom_call.1']
    #allocation12 [shape = 'u8[16384]{0}', space=vmem, size = 0x4000, scoped, tag = 'output window, operand 0, single buffered']
    %14 = vsyncpa [#allocation5], 0
    %15 = vsyncpa [#allocation8], 0
    %16 = vsyncpa [#allocation11], 0
    %17 = vsyncpa [#allocation6], 0
    // Predicated region
    $region2: #{tpu_custom_call.1} parent=1 // pred_check
      _
    $region3: #{tpu_custom_call.1} parent=1 // pred_check_branch
      %19 = sbr.rel (0) target = $region5
    $region4: #{tpu_custom_call.1} parent=1 // pred_region
      %s21 = ssub.s32 512, 512
      %22 = vsyncadd [#allocation5], %s21
      %s23 = sshll.u32 [#allocation4], 4
      %s24 = int_to_ptr.vmem [resolvable:$true] %s23
      %29 = dma.hbm_to_vmem [thread:$0]  %s0, 512, %s24, [#allocation5], 128, 128, 8
    $region5: #{tpu_custom_call.1} parent=1 // pred_fallthru
      _
    // Predicated region
    $region6: #{tpu_custom_call.1} parent=1 // pred_check
      _
    $region7: #{tpu_custom_call.1} parent=1 // pred_check_branch
      %31 = sbr.rel (0) target = $region9
    $region8: #{tpu_custom_call.1} parent=1 // pred_region
      %s33 = ssub.s32 256, 256
      %34 = vsyncadd [#allocation8], %s33
      %s35 = sshll.u32 [#allocation7], 4
      %s36 = int_to_ptr.vmem [resolvable:$true] %s35
      %41 = dma.hbm_to_vmem [thread:$0]  %s1, 256, %s36, [#allocation8], 128, 128, 8
    $region9: #{tpu_custom_call.1} parent=1 // pred_fallthru
      _
    // Predicated region
    $region10: #{tpu_custom_call.1} parent=1 // pred_check
      _
    $region11: #{tpu_custom_call.1} parent=1 // pred_check_branch
      %43 = sbr.rel (0) target = $region13
    $region12: #{tpu_custom_call.1} parent=1 // pred_region
      %s45 = ssub.s32 1024, 1024
      %46 = vsyncadd [#allocation8], %s45
      %s47 = sshll.u32 [#allocation9], 4
      %s48 = int_to_ptr.vmem [resolvable:$true] %s47
      %53 = dma.hbm_to_vmem [thread:$0]  %s2, 1024, %s48, [#allocation8], 128, 128, 8
    $region13: #{tpu_custom_call.1} parent=1 // pred_fallthru
      _
    // Predicated region
    $region14: #{tpu_custom_call.1} parent=1 // pred_check
      _
    $region15: #{tpu_custom_call.1} parent=1 // pred_check_branch
      %55 = sbr.rel (0) target = $region17
    $region16: #{tpu_custom_call.1} parent=1 // pred_region
      _
    $region17: #{tpu_custom_call.1} parent=1 // pred_fallthru
      _
    // Predicated region
    $region18: #{tpu_custom_call.1} parent=1 // pred_check
      _
    $region19: #{tpu_custom_call.1} parent=1 // pred_check_branch
      %57 = sbr.rel (0) target = $region21
    $region20: #{tpu_custom_call.1} parent=1 // pred_region
      _
    $region21: #{tpu_custom_call.1} parent=1 // pred_fallthru
      _
    // Predicated region
    $region22: #{tpu_custom_call.1} parent=1 // pred_check
      _
    $region23: #{tpu_custom_call.1} parent=1 // pred_check_branch
      %59 = sbr.rel (0) target = $region25
    $region24: #{tpu_custom_call.1} parent=1 // pred_region
      _
    $region25: #{tpu_custom_call.1} parent=1 // pred_fallthru
      _
    // Predicated region
    $region26: #{tpu_custom_call.1} parent=1 // pred_check
      _
    $region27: #{tpu_custom_call.1} parent=1 // pred_check_branch
      %61 = sbr.rel (0) target = $region29
    $region28: #{tpu_custom_call.1} parent=1 // pred_region
      %s63 = ssub.s32 1024, 1024
      %64 = vsyncadd [#allocation11], %s63
      %s65 = sshll.u32 [#allocation10], 4
      %s66 = int_to_ptr.vmem [resolvable:$true] %s65
      %71 = dma.hbm_to_vmem [thread:$0]  %s6, 1024, %s66, [#allocation11], 128, 128, 8
    $region29: #{tpu_custom_call.1} parent=1 // pred_fallthru
      _
    // Predicated region
    $region30: #{tpu_custom_call.1} parent=1 // pred_check
      _
    $region31: #{tpu_custom_call.1} parent=1 // pred_check_branch
      %73 = sbr.rel (0) target = $region33
    $region32: #{tpu_custom_call.1} parent=1 // pred_region
      _
    $region33: #{tpu_custom_call.1} parent=1 // pred_fallthru
      _
    // Predicated region
    $region34: #{tpu_custom_call.1} parent=1 // pred_check
      _
    $region35: #{tpu_custom_call.1} parent=1 // pred_check_branch
      %75 = sbr.rel (0) target = $region37
    $region36: #{tpu_custom_call.1} parent=1 // pred_region
      _
    $region37: #{tpu_custom_call.1} parent=1 // pred_fallthru
      _
    // Predicated region
    $region38: #{tpu_custom_call.1} parent=1 // pred_check
      _
    $region39: #{tpu_custom_call.1} parent=1 // pred_check_branch
      %77 = sbr.rel (0) target = $region41
    $region40: #{tpu_custom_call.1} parent=1 // pred_region
      %78 = dma.done [#allocation5], 512
    $region41: #{tpu_custom_call.1} parent=1 // pred_fallthru
      _
    // Predicated region
    $region42: #{tpu_custom_call.1} parent=1 // pred_check
      _
    $region43: #{tpu_custom_call.1} parent=1 // pred_check_branch
      %80 = sbr.rel (0) target = $region45
    $region44: #{tpu_custom_call.1} parent=1 // pred_region
      %81 = dma.done [#allocation8], 256
    $region45: #{tpu_custom_call.1} parent=1 // pred_fallthru
      _
    // Predicated region
    $region46: #{tpu_custom_call.1} parent=1 // pred_check
      _
    $region47: #{tpu_custom_call.1} parent=1 // pred_check_branch
      %83 = sbr.rel (0) target = $region49
    $region48: #{tpu_custom_call.1} parent=1 // pred_region
      %84 = dma.done [#allocation8], 1024
    $region49: #{tpu_custom_call.1} parent=1 // pred_fallthru
      _
    // Predicated region
    $region50: #{tpu_custom_call.1} parent=1 // pred_check
      _
    $region51: #{tpu_custom_call.1} parent=1 // pred_check_branch
      %86 = sbr.rel (0) target = $region53
    $region52: #{tpu_custom_call.1} parent=1 // pred_region
      %87 = dma.done [#allocation11], 1024
    $region53: #{tpu_custom_call.1} parent=1 // pred_fallthru
      _
    %v88 = vld [vmem:[#allocation4] sm:$0xff]
    %v89 = vld [vmem:[#allocation4 + $0x8] sm:$0xff]
    %v90 = vld [vmem:[#allocation4 + $0x10] sm:$0xff]
    %v91 = vld [vmem:[#allocation4 + $0x18] sm:$0xff]
    %v92 = vmax.f32 %v88, 0.0
    %v93 = vmax.f32 %v89, 0.0
    %v94 = vmax.f32 %v90, 0.0
    %v95 = vmax.f32 %v91, 0.0
    %100 = vrot.lane.b32.xlu0 %v92, 4
    %v101 = vpop.permute.xlu0 %100
    %102 = vrot.lane.b32.xlu0 %v93, 4
    %v103 = vpop.permute.xlu0 %102
    %104 = vrot.lane.b32.xlu0 %v94, 4
    %v105 = vpop.permute.xlu0 %104
    %106 = vrot.lane.b32.xlu0 %v95, 4
    %v107 = vpop.permute.xlu0 %106
    %vm112 = vcmask 31744
    %v113 = vsel %vm112, 0.0, %v101
    %v114 = vsel %vm112, 0.0, %v103
    %v115 = vsel %vm112, 0.0, %v105
    %v116 = vsel %vm112, 0.0, %v107
    %vm117 = vcmask 556032
    %v118 = vsel %vm117, %v113, 0.0
    %v119 = vsel %vm117, %v114, 0.0
    %v120 = vsel %vm117, %v115, 0.0
    %v121 = vsel %vm117, %v116, 0.0
    %vm126 = vcmask 1040384
    %v127 = vrot.slane %v118, 7
    %v128 = vrot.slane %v119, 7
    %v129 = vsel %vm126, %v127, %v128
    %v130 = vrot.slane %v120, 7
    %v131 = vrot.slane %v121, 7
    %v132 = vsel %vm126, %v130, %v131
    %v139 = vsel %vm126, 0.0, %v127
    %v140 = vsel %vm126, 0.0, %v130
    %v141 = vsel %vm126, %v128, 0.0
    %v142 = vsel %vm126, %v131, 0.0
    %vm143 = vcmask 588800
    %144 = vst.msk [vmem:[#allocation2] sm:$0xff] %vm143, %v139
    %145 = vst.msk [vmem:[#allocation2 + $0x8] sm:$0xff] %vm143, %v129
    %vm146 = vcmask 582656
    %147 = vst.msk [vmem:[#allocation2 + $0x10] sm:$0x3] %vm146, %v141
    %148 = vst.msk [vmem:[#allocation2 + $0x18] sm:$0xff] %vm143, %v140
    %149 = vst.msk [vmem:[#allocation2 + $0x20] sm:$0xff] %vm143, %v132
    %150 = vst.msk [vmem:[#allocation2 + $0x28] sm:$0x3] %vm146, %v142
    %v151 = vld [vmem:[#allocation7] sm:$0xff]
    %v152 = vld [vmem:[#allocation7 + $0x8] sm:$0x1]
    %v153 = vld [vmem:[#allocation2] sm:$0xff]
    %v154 = vld [vmem:[#allocation2 + $0x8] sm:$0xff]
    %v155 = vld [vmem:[#allocation2 + $0x18] sm:$0xff]
    %v156 = vld [vmem:[#allocation2 + $0x20] sm:$0xff]
    %v157 = vlaneseq
    %v158 = vshrl.u32 %v157, 7
    %v159 = vsub.s32 0, %v158
    %v160 = vrot.slane %v151, %v159
    %v161 = vmul.f32 %v153, %v160
    %v162 = vmul.f32 %v154, %v160
    %v163 = vmul.f32 %v155, %v160
    %v164 = vmul.f32 %v156, %v160
    %v165 = vadd.f32 %v161, 0.0
    %v166 = vadd.f32 %v162, 0.0
    %v167 = vadd.f32 %v163, 0.0
    %v168 = vadd.f32 %v164, 0.0
    %v169 = vlaneseq
    %v170 = vshrl.u32 %v169, 7
    %v171 = vsub.s32 1, %v170
    %v172 = vrot.slane %v151, %v171
    %174 = vrot.lane.b32.xlu0 %v172, 4
    %v175 = vpop.permute.xlu0 %174
    %v177 = vmul.f32 %v153, %v175
    %v178 = vmul.f32 %v154, %v175
    %v179 = vmul.f32 %v155, %v175
    %v180 = vmul.f32 %v156, %v175
    %185 = vrot.lane.b32.xlu0 %v177, 124
    %v186 = vpop.permute.xlu0 %185
    %187 = vrot.lane.b32.xlu0 %v178, 124
    %v188 = vpop.permute.xlu0 %187
    %189 = vrot.lane.b32.xlu0 %v179, 124
    %v190 = vpop.permute.xlu0 %189
    %191 = vrot.lane.b32.xlu0 %v180, 124
    %v192 = vpop.permute.xlu0 %191
    %v197 = vadd.f32 %v165, %v186
    %v198 = vadd.f32 %v166, %v188
    %v199 = vadd.f32 %v167, %v190
    %v200 = vadd.f32 %v168, %v192
    %v201 = vlaneseq
    %v202 = vshrl.u32 %v201, 7
    %v203 = vsub.s32 2, %v202
    %v204 = vrot.slane %v151, %v203
    %206 = vrot.lane.b32.xlu0 %v204, 8
    %v207 = vpop.permute.xlu0 %206
    %v209 = vmul.f32 %v153, %v207
    %v210 = vmul.f32 %v154, %v207
    %v211 = vmul.f32 %v155, %v207
    %v212 = vmul.f32 %v156, %v207
    %217 = vrot.lane.b32.xlu0 %v209, 120
    %v218 = vpop.permute.xlu0 %217
    %219 = vrot.lane.b32.xlu0 %v210, 120
    %v220 = vpop.permute.xlu0 %219
    %221 = vrot.lane.b32.xlu0 %v211, 120
    %v222 = vpop.permute.xlu0 %221
    %223 = vrot.lane.b32.xlu0 %v212, 120
    %v224 = vpop.permute.xlu0 %223
    %v229 = vadd.f32 %v197, %v218
    %v230 = vadd.f32 %v198, %v220
    %v231 = vadd.f32 %v199, %v222
    %v232 = vadd.f32 %v200, %v224
    %v233 = vld [vmem:[#allocation2 + $0x1] sm:$0xff]
    %v234 = vld [vmem:[#allocation2 + $0x9] sm:$0xff]
    %v235 = vld [vmem:[#allocation2 + $0x19] sm:$0xff]
    %v236 = vld [vmem:[#allocation2 + $0x21] sm:$0xff]
    %v237 = vlaneseq
    %v238 = vshrl.u32 %v237, 7
    %v239 = vsub.s32 3, %v238
    %v240 = vrot.slane %v151, %v239
    %v241 = vmul.f32 %v233, %v240
    %v242 = vmul.f32 %v234, %v240
    %v243 = vmul.f32 %v235, %v240
    %v244 = vmul.f32 %v236, %v240
    %v245 = vadd.f32 %v229, %v241
    %v246 = vadd.f32 %v230, %v242
    %v247 = vadd.f32 %v231, %v243
    %v248 = vadd.f32 %v232, %v244
    %v249 = vlaneseq
    %v250 = vshrl.u32 %v249, 7
    %v251 = vsub.s32 4, %v250
    %v252 = vrot.slane %v151, %v251
    %254 = vrot.lane.b32.xlu0 %v252, 4
    %v255 = vpop.permute.xlu0 %254
    %v257 = vmul.f32 %v233, %v255
    %v258 = vmul.f32 %v234, %v255
    %v259 = vmul.f32 %v235, %v255
    %v260 = vmul.f32 %v236, %v255
    %265 = vrot.lane.b32.xlu0 %v257, 124
    %v266 = vpop.permute.xlu0 %265
    %267 = vrot.lane.b32.xlu0 %v258, 124
    %v268 = vpop.permute.xlu0 %267
    %269 = vrot.lane.b32.xlu0 %v259, 124
    %v270 = vpop.permute.xlu0 %269
    %271 = vrot.lane.b32.xlu0 %v260, 124
    %v272 = vpop.permute.xlu0 %271
    %v277 = vadd.f32 %v245, %v266
    %v278 = vadd.f32 %v246, %v268
    %v279 = vadd.f32 %v247, %v270
    %v280 = vadd.f32 %v248, %v272
    %v281 = vlaneseq
    %v282 = vshrl.u32 %v281, 7
    %v283 = vsub.s32 5, %v282
    %v284 = vrot.slane %v151, %v283
    %286 = vrot.lane.b32.xlu0 %v284, 8
    %v287 = vpop.permute.xlu0 %286
    %v289 = vmul.f32 %v233, %v287
    %v290 = vmul.f32 %v234, %v287
    %v291 = vmul.f32 %v235, %v287
    %v292 = vmul.f32 %v236, %v287
    %297 = vrot.lane.b32.xlu0 %v289, 120
    %v298 = vpop.permute.xlu0 %297
    %299 = vrot.lane.b32.xlu0 %v290, 120
    %v300 = vpop.permute.xlu0 %299
    %301 = vrot.lane.b32.xlu0 %v291, 120
    %v302 = vpop.permute.xlu0 %301
    %303 = vrot.lane.b32.xlu0 %v292, 120
    %v304 = vpop.permute.xlu0 %303
    %v309 = vadd.f32 %v277, %v298
    %v310 = vadd.f32 %v278, %v300
    %v311 = vadd.f32 %v279, %v302
    %v312 = vadd.f32 %v280, %v304
    %v313 = vld [vmem:[#allocation2 + $0x2] sm:$0xff]
    %v314 = vld [vmem:[#allocation2 + $0xa] sm:$0xff]
    %v315 = vld [vmem:[#allocation2 + $0x1a] sm:$0xff]
    %v316 = vld [vmem:[#allocation2 + $0x22] sm:$0xff]
    %v317 = vlaneseq
    %v318 = vshrl.u32 %v317, 7
    %v319 = vsub.s32 6, %v318
    %v320 = vrot.slane %v151, %v319
    %v321 = vmul.f32 %v313, %v320
    %v322 = vmul.f32 %v314, %v320
    %v323 = vmul.f32 %v315, %v320
    %v324 = vmul.f32 %v316, %v320
    %v325 = vadd.f32 %v309, %v321
    %v326 = vadd.f32 %v310, %v322
    %v327 = vadd.f32 %v311, %v323
    %v328 = vadd.f32 %v312, %v324
    %v329 = vlaneseq
    %v330 = vshrl.u32 %v329, 7
    %v331 = vsub.s32 7, %v330
    %v332 = vrot.slane %v151, %v331
    %334 = vrot.lane.b32.xlu0 %v332, 4
    %v335 = vpop.permute.xlu0 %334
    %v337 = vmul.f32 %v313, %v335
    %v338 = vmul.f32 %v314, %v335
    %v339 = vmul.f32 %v315, %v335
    %v340 = vmul.f32 %v316, %v335
    %345 = vrot.lane.b32.xlu0 %v337, 124
    %v346 = vpop.permute.xlu0 %345
    %347 = vrot.lane.b32.xlu0 %v338, 124
    %v348 = vpop.permute.xlu0 %347
    %349 = vrot.lane.b32.xlu0 %v339, 124
    %v350 = vpop.permute.xlu0 %349
    %351 = vrot.lane.b32.xlu0 %v340, 124
    %v352 = vpop.permute.xlu0 %351
    %v357 = vadd.f32 %v325, %v346
    %v358 = vadd.f32 %v326, %v348
    %v359 = vadd.f32 %v327, %v350
    %v360 = vadd.f32 %v328, %v352
    %v361 = vlaneseq
    %v362 = vshrl.u32 %v361, 7
    %v363 = vsub.s32 0, %v362
    %v364 = vrot.slane %v152, %v363
    %366 = vrot.lane.b32.xlu0 %v364, 8
    %v367 = vpop.permute.xlu0 %366
    %v369 = vmul.f32 %v313, %v367
    %v370 = vmul.f32 %v314, %v367
    %v371 = vmul.f32 %v315, %v367
    %v372 = vmul.f32 %v316, %v367
    %377 = vrot.lane.b32.xlu0 %v369, 120
    %v378 = vpop.permute.xlu0 %377
    %379 = vrot.lane.b32.xlu0 %v370, 120
    %v380 = vpop.permute.xlu0 %379
    %381 = vrot.lane.b32.xlu0 %v371, 120
    %v382 = vpop.permute.xlu0 %381
    %383 = vrot.lane.b32.xlu0 %v372, 120
    %v384 = vpop.permute.xlu0 %383
    %v389 = vadd.f32 %v357, %v378
    %v390 = vadd.f32 %v358, %v380
    %v391 = vadd.f32 %v359, %v382
    %v392 = vadd.f32 %v360, %v384
    %v393 = vld [vmem:[#allocation9] sm:$0xff]
    %v394 = vld [vmem:[#allocation9 + $0x8] sm:$0xff]
    %v395 = vld [vmem:[#allocation9 + $0x10] sm:$0xff]
    %v396 = vld [vmem:[#allocation9 + $0x18] sm:$0xff]
    %v397 = vld [vmem:[#allocation9 + $0x20] sm:$0xff]
    %v398 = vld [vmem:[#allocation9 + $0x28] sm:$0xff]
    %v399 = vld [vmem:[#allocation9 + $0x30] sm:$0xff]
    %v400 = vld [vmem:[#allocation9 + $0x38] sm:$0xff]
    %vm401 = vcmask 523264
    %v403 = vsel %vm401, %v389, 0
    %v406 = vsel %vm401, %v390, 0
    %v409 = vsel %vm401, %v391, 0
    %v412 = vsel %vm401, %v392, 0
    %414 = vmatprep.subr.mxu0 0.0
    %415 = vmatpush1.msra.mxu0 %v393
    %416 = vmatprep.subr.mxu0 0.0
    %417 = vmatpush1.msra.mxu0 %v394
    %418 = vmatprep.subr.mxu0 0.0
    %419 = vmatpush1.msra.mxu0 %v395
    %420 = vmatprep.subr.mxu0 0.0
    %421 = vmatpush1.msra.mxu0 %v396
    %422 = vmatprep.subr.mxu0 0.0
    %423 = vmatpush1.msra.mxu0 %v397
    %424 = vmatprep.subr.mxu0 0.0
    %425 = vmatpush1.msra.mxu0 %v398
    %426 = vmatprep.subr.mxu0 0.0
    %427 = vmatpush1.msra.mxu0 %v399
    %428 = vmatprep.subr.mxu0 0.0
    %429 = vmatpush1.msra.mxu0 %v400
    %430 = vmatprep.subr.mxu0 0.0
    %431 = vmatpush1.msra.mxu0 0.0
    %432 = vmatprep.subr.mxu0 0.0
    %433 = vmatpush1.msra.mxu0 0.0
    %434 = vmatprep.subr.mxu0 0.0
    %435 = vmatpush1.msra.mxu0 0.0
    %436 = vmatprep.subr.mxu0 0.0
    %437 = vmatpush1.msra.mxu0 0.0
    %438 = vmatprep.subr.mxu0 0.0
    %439 = vmatpush1.msra.mxu0 0.0
    %440 = vmatprep.subr.mxu0 0.0
    %441 = vmatpush1.msra.mxu0 0.0
    %442 = vmatprep.subr.mxu0 0.0
    %443 = vmatpush1.msra.mxu0 0.0
    %444 = vmatprep.subr.mxu0 0.0
    %445 = vmatpush1.msra.mxu0 0.0
    %446 = vmatprep.subr.mxu0 0.0
    %447 = vmatpush1.msra.mxu0 0.0
    %448 = vmatprep.subr.mxu0 0.0
    %449 = vmatpush1.msra.mxu0 0.0
    %450 = vmatprep.subr.mxu0 0.0
    %451 = vmatpush1.msra.mxu0 0.0
    %452 = vmatprep.subr.mxu0 0.0
    %453 = vmatpush1.msra.mxu0 0.0
    %454 = vmatprep.subr.mxu0 0.0
    %455 = vmatpush1.msra.mxu0 0.0
    %456 = vmatprep.subr.mxu0 0.0
    %457 = vmatpush1.msra.mxu0 0.0
    %458 = vmatprep.subr.mxu0 0.0
    %459 = vmatpush1.msra.mxu0 0.0
    %460 = vmatprep.subr.mxu0 0.0
    %461 = vmatpush1.msra.mxu0 0.0
    %462 = vmatprep.subr.mxu0 0.0
    %463 = vmatpush1.msra.mxu0 0.0
    %464 = vmatprep.subr.mxu0 0.0
    %465 = vmatpush1.msra.mxu0 0.0
    %466 = vmatprep.subr.mxu0 0.0
    %467 = vmatpush1.msra.mxu0 0.0
    %468 = vmatprep.subr.mxu0 0.0
    %469 = vmatpush1.msra.mxu0 0.0
    %470 = vmatprep.subr.mxu0 0.0
    %471 = vmatpush1.msra.mxu0 0.0
    %472 = vmatprep.subr.mxu0 0.0
    %473 = vmatpush1.msra.mxu0 0.0
    %474 = vmatprep.subr.mxu0 0.0
    %475 = vmatpush1.msra.mxu0 0.0
    %476 = vmatprep.subr.mxu0 0.0
    %477 = vmatpush1.msra.mxu0 0.0
    %478 = vmatprep.mubr.f32.mxu0 0.0
    %479 = vmatmul.mubr.f32.gmra.mrb[0].mxu0 %v403
    %v480 = vpop.f32.mrb[0].mxu0
    %v481 = vadd.f32 0.0, %v480
    %v482 = vpop.f32.mrb[0].mxu0
    %483 = vmatprep.mubr.f32.mxu0 0.0
    %484 = vmatmul.mubr.f32.gmra.mrb[0].mxu0 %v406
    %v485 = vpop.f32.mrb[0].mxu0
    %v486 = vadd.f32 0.0, %v485
    %v487 = vpop.f32.mrb[0].mxu0
    %488 = vmatprep.mubr.f32.mxu0 0.0
    %489 = vmatmul.mubr.f32.gmra.mrb[0].mxu0 %v409
    %v490 = vpop.f32.mrb[0].mxu0
    %v491 = vadd.f32 0.0, %v490
    %v492 = vpop.f32.mrb[0].mxu0
    %493 = vmatprep.mubr.f32.mxu0 0.0
    %494 = vmatmul.mubr.f32.gmra.mrb[0].mxu0 %v412
    %v495 = vpop.f32.mrb[0].mxu0
    %v496 = vadd.f32 0.0, %v495
    %v497 = vpop.f32.mrb[0].mxu0
    %498 = vdwg.mxu0
    %v499 = vld [vmem:[%s3] sm:$0x1]
    %v500 = vld [vmem:[%s4] sm:$0x1]
    %v501 = vsel %vm401, %v481, 0.0
    %v502 = vsel %vm401, %v486, 0.0
    %v503 = vadd.f32 %v501, %v502
    %v504 = vsel %vm401, %v491, 0.0
    %v505 = vadd.f32 %v503, %v504
    %v506 = vsel %vm401, %v496, 0.0
    %v507 = vadd.f32 %v505, %v506
    %v508 = vrot.slane %v507, 4
    %v509 = vadd.f32 %v507, %v508
    %v510 = vrot.slane %v509, 2
    %v511 = vadd.f32 %v509, %v510
    %v512 = vrot.slane %v511, 1
    %v513 = vadd.f32 %v511, %v512
    %v514 = vmul.f32 %v481, %v481
    %v515 = vmul.f32 %v486, %v486
    %v516 = vmul.f32 %v491, %v491
    %v517 = vmul.f32 %v496, %v496
    %v518 = vsel %vm401, %v514, 0.0
    %v519 = vsel %vm401, %v515, 0.0
    %v520 = vadd.f32 %v518, %v519
    %v521 = vsel %vm401, %v516, 0.0
    %v522 = vadd.f32 %v520, %v521
    %v523 = vsel %vm401, %v517, 0.0
    %v524 = vadd.f32 %v522, %v523
    %v525 = vrot.slane %v524, 4
    %v526 = vadd.f32 %v524, %v525
    %v527 = vrot.slane %v526, 2
    %v528 = vadd.f32 %v526, %v527
    %v529 = vrot.slane %v528, 1
    %v530 = vadd.f32 %v528, %v529
    %532 = vrot.lane.b32.xlu0 %v513, 68
    %v533 = vpop.permute.xlu0 %532
    %535 = vrot.lane.b32.xlu0 %v513, 4
    %v536 = vpop.permute.xlu0 %535
    %v538 = vsel %vm112, %v533, %v536
    %v539 = vadd.f32 %v513, %v538
    %541 = vrot.lane.b32.xlu0 %v539, 72
    %v542 = vpop.permute.xlu0 %541
    %544 = vrot.lane.b32.xlu0 %v539, 8
    %v545 = vpop.permute.xlu0 %544
    %vm547 = vcmask 64512
    %v548 = vsel %vm547, %v542, %v545
    %v549 = vadd.f32 %v539, %v548
    %551 = vrot.lane.b32.xlu0 %v549, 80
    %v552 = vpop.permute.xlu0 %551
    %554 = vrot.lane.b32.xlu0 %v549, 16
    %v555 = vpop.permute.xlu0 %554
    %vm557 = vcmask 130048
    %v558 = vsel %vm557, %v552, %v555
    %v559 = vadd.f32 %v549, %v558
    %561 = vrot.lane.b32.xlu0 %v559, 96
    %v562 = vpop.permute.xlu0 %561
    %564 = vrot.lane.b32.xlu0 %v559, 32
    %v565 = vpop.permute.xlu0 %564
    %vm567 = vcmask 261120
    %v568 = vsel %vm567, %v562, %v565
    %v569 = vadd.f32 %v559, %v568
    %571 = vrot.lane.b32.xlu0 %v530, 68
    %v572 = vpop.permute.xlu0 %571
    %574 = vrot.lane.b32.xlu0 %v530, 4
    %v575 = vpop.permute.xlu0 %574
    %v577 = vsel %vm112, %v572, %v575
    %v578 = vadd.f32 %v530, %v577
    %580 = vrot.lane.b32.xlu0 %v578, 72
    %v581 = vpop.permute.xlu0 %580
    %583 = vrot.lane.b32.xlu0 %v578, 8
    %v584 = vpop.permute.xlu0 %583
    %v586 = vsel %vm547, %v581, %v584
    %v587 = vadd.f32 %v578, %v586
    %589 = vrot.lane.b32.xlu0 %v587, 80
    %v590 = vpop.permute.xlu0 %589
    %592 = vrot.lane.b32.xlu0 %v587, 16
    %v593 = vpop.permute.xlu0 %592
    %v595 = vsel %vm557, %v590, %v593
    %v596 = vadd.f32 %v587, %v595
    %598 = vrot.lane.b32.xlu0 %v596, 96
    %v599 = vpop.permute.xlu0 %598
    %601 = vrot.lane.b32.xlu0 %v596, 32
    %v602 = vpop.permute.xlu0 %601
    %v604 = vsel %vm567, %v599, %v602
    %v605 = vadd.f32 %v596, %v604
    %v606 = vmul.f32 %v569, 0.001953125
    %v607 = vmul.f32 %v605, 0.001953125
    %v608 = vmul.f32 %v606, %v606
    %v609 = vsub.f32 %v607, %v608
    %v610 = vadd.f32 %v609, 1e-05
    %v611 = vrsqrt.pop %v610
    %v612 = vmul.f32 %v499, %v611
    %v613 = vmul.f32 %v606, %v612
    %v614 = vsub.f32 %v500, %v613
    %v616 = vlaneseq
    %v617 = vshrl.u32 %v616, 7
    %v618 = vsub.s32 0, %v617
    %v619 = vrot.slane %v612, %v618
    %v621 = vmul.f32 %v481, %v619
    %v622 = vmul.f32 %v486, %v619
    %v623 = vmul.f32 %v491, %v619
    %v624 = vmul.f32 %v496, %v619
    %v626 = vlaneseq
    %v627 = vshrl.u32 %v626, 7
    %v628 = vsub.s32 0, %v627
    %v629 = vrot.slane %v614, %v628
    %v631 = vadd.f32 %v621, %v629
    %v632 = vadd.f32 %v622, %v629
    %v633 = vadd.f32 %v623, %v629
    %v634 = vadd.f32 %v624, %v629
    %v635 = vmax.f32 %v631, 0.0
    %v636 = vmax.f32 %v632, 0.0
    %v637 = vmax.f32 %v633, 0.0
    %v638 = vmax.f32 %v634, 0.0
    %643 = vrot.lane.b32.xlu0 %v635, 4
    %v644 = vpop.permute.xlu0 %643
    %645 = vrot.lane.b32.xlu0 %v636, 4
    %v646 = vpop.permute.xlu0 %645
    %647 = vrot.lane.b32.xlu0 %v637, 4
    %v648 = vpop.permute.xlu0 %647
    %649 = vrot.lane.b32.xlu0 %v638, 4
    %v650 = vpop.permute.xlu0 %649
    %v655 = vsel %vm112, 0.0, %v644
    %v656 = vsel %vm112, 0.0, %v646
    %v657 = vsel %vm112, 0.0, %v648
    %v658 = vsel %vm112, 0.0, %v650
    %v659 = vsel %vm117, %v655, 0.0
    %v660 = vsel %vm117, %v656, 0.0
    %v661 = vsel %vm117, %v657, 0.0
    %v662 = vsel %vm117, %v658, 0.0
    %v667 = vrot.slane %v659, 7
    %v668 = vrot.slane %v660, 7
    %v669 = vsel %vm126, %v667, %v668
    %v670 = vrot.slane %v661, 7
    %v671 = vrot.slane %v662, 7
    %v672 = vsel %vm126, %v670, %v671
    %v679 = vsel %vm126, 0.0, %v667
    %v680 = vsel %vm126, 0.0, %v670
    %v681 = vsel %vm126, %v668, 0.0
    %v682 = vsel %vm126, %v671, 0.0
    %683 = vst.msk [vmem:[#allocation3] sm:$0xff] %vm143, %v679
    %684 = vst.msk [vmem:[#allocation3 + $0x8] sm:$0xff] %vm143, %v669
    %685 = vst.msk [vmem:[#allocation3 + $0x10] sm:$0x3] %vm146, %v681
    %686 = vst.msk [vmem:[#allocation3 + $0x18] sm:$0xff] %vm143, %v680
    %687 = vst.msk [vmem:[#allocation3 + $0x20] sm:$0xff] %vm143, %v672
    %688 = vst.msk [vmem:[#allocation3 + $0x28] sm:$0x3] %vm146, %v682
    %v689 = vld [vmem:[%s5] sm:$0xff]
    %v690 = vld [vmem:[%s5 + $0x8] sm:$0x1]
    %v691 = vld [vmem:[#allocation3] sm:$0xff]
    %v692 = vld [vmem:[#allocation3 + $0x8] sm:$0xff]
    %v693 = vld [vmem:[#allocation3 + $0x18] sm:$0xff]
    %v694 = vld [vmem:[#allocation3 + $0x20] sm:$0xff]
    %v695 = vlaneseq
    %v696 = vshrl.u32 %v695, 7
    %v697 = vsub.s32 0, %v696
    %v698 = vrot.slane %v689, %v697
    %v699 = vmul.f32 %v691, %v698
    %v700 = vmul.f32 %v692, %v698
    %v701 = vmul.f32 %v693, %v698
    %v702 = vmul.f32 %v694, %v698
    %v703 = vadd.f32 %v699, 0.0
    %v704 = vadd.f32 %v700, 0.0
    %v705 = vadd.f32 %v701, 0.0
    %v706 = vadd.f32 %v702, 0.0
    %v707 = vlaneseq
    %v708 = vshrl.u32 %v707, 7
    %v709 = vsub.s32 1, %v708
    %v710 = vrot.slane %v689, %v709
    %712 = vrot.lane.b32.xlu0 %v710, 4
    %v713 = vpop.permute.xlu0 %712
    %v715 = vmul.f32 %v691, %v713
    %v716 = vmul.f32 %v692, %v713
    %v717 = vmul.f32 %v693, %v713
    %v718 = vmul.f32 %v694, %v713
    %723 = vrot.lane.b32.xlu0 %v715, 124
    %v724 = vpop.permute.xlu0 %723
    %725 = vrot.lane.b32.xlu0 %v716, 124
    %v726 = vpop.permute.xlu0 %725
    %727 = vrot.lane.b32.xlu0 %v717, 124
    %v728 = vpop.permute.xlu0 %727
    %729 = vrot.lane.b32.xlu0 %v718, 124
    %v730 = vpop.permute.xlu0 %729
    %v735 = vadd.f32 %v703, %v724
    %v736 = vadd.f32 %v704, %v726
    %v737 = vadd.f32 %v705, %v728
    %v738 = vadd.f32 %v706, %v730
    %v739 = vlaneseq
    %v740 = vshrl.u32 %v739, 7
    %v741 = vsub.s32 2, %v740
    %v742 = vrot.slane %v689, %v741
    %744 = vrot.lane.b32.xlu0 %v742, 8
    %v745 = vpop.permute.xlu0 %744
    %v747 = vmul.f32 %v691, %v745
    %v748 = vmul.f32 %v692, %v745
    %v749 = vmul.f32 %v693, %v745
    %v750 = vmul.f32 %v694, %v745
    %755 = vrot.lane.b32.xlu0 %v747, 120
    %v756 = vpop.permute.xlu0 %755
    %757 = vrot.lane.b32.xlu0 %v748, 120
    %v758 = vpop.permute.xlu0 %757
    %759 = vrot.lane.b32.xlu0 %v749, 120
    %v760 = vpop.permute.xlu0 %759
    %761 = vrot.lane.b32.xlu0 %v750, 120
    %v762 = vpop.permute.xlu0 %761
    %v767 = vadd.f32 %v735, %v756
    %v768 = vadd.f32 %v736, %v758
    %v769 = vadd.f32 %v737, %v760
    %v770 = vadd.f32 %v738, %v762
    %v771 = vld [vmem:[#allocation3 + $0x1] sm:$0xff]
    %v772 = vld [vmem:[#allocation3 + $0x9] sm:$0xff]
    %v773 = vld [vmem:[#allocation3 + $0x19] sm:$0xff]
    %v774 = vld [vmem:[#allocation3 + $0x21] sm:$0xff]
    %v775 = vlaneseq
    %v776 = vshrl.u32 %v775, 7
    %v777 = vsub.s32 3, %v776
    %v778 = vrot.slane %v689, %v777
    %v779 = vmul.f32 %v771, %v778
    %v780 = vmul.f32 %v772, %v778
    %v781 = vmul.f32 %v773, %v778
    %v782 = vmul.f32 %v774, %v778
    %v783 = vadd.f32 %v767, %v779
    %v784 = vadd.f32 %v768, %v780
    %v785 = vadd.f32 %v769, %v781
    %v786 = vadd.f32 %v770, %v782
    %v787 = vlaneseq
    %v788 = vshrl.u32 %v787, 7
    %v789 = vsub.s32 4, %v788
    %v790 = vrot.slane %v689, %v789
    %792 = vrot.lane.b32.xlu0 %v790, 4
    %v793 = vpop.permute.xlu0 %792
    %v795 = vmul.f32 %v771, %v793
    %v796 = vmul.f32 %v772, %v793
    %v797 = vmul.f32 %v773, %v793
    %v798 = vmul.f32 %v774, %v793
    %803 = vrot.lane.b32.xlu0 %v795, 124
    %v804 = vpop.permute.xlu0 %803
    %805 = vrot.lane.b32.xlu0 %v796, 124
    %v806 = vpop.permute.xlu0 %805
    %807 = vrot.lane.b32.xlu0 %v797, 124
    %v808 = vpop.permute.xlu0 %807
    %809 = vrot.lane.b32.xlu0 %v798, 124
    %v810 = vpop.permute.xlu0 %809
    %v815 = vadd.f32 %v783, %v804
    %v816 = vadd.f32 %v784, %v806
    %v817 = vadd.f32 %v785, %v808
    %v818 = vadd.f32 %v786, %v810
    %v819 = vlaneseq
    %v820 = vshrl.u32 %v819, 7
    %v821 = vsub.s32 5, %v820
    %v822 = vrot.slane %v689, %v821
    %824 = vrot.lane.b32.xlu0 %v822, 8
    %v825 = vpop.permute.xlu0 %824
    %v827 = vmul.f32 %v771, %v825
    %v828 = vmul.f32 %v772, %v825
    %v829 = vmul.f32 %v773, %v825
    %v830 = vmul.f32 %v774, %v825
    %835 = vrot.lane.b32.xlu0 %v827, 120
    %v836 = vpop.permute.xlu0 %835
    %837 = vrot.lane.b32.xlu0 %v828, 120
    %v838 = vpop.permute.xlu0 %837
    %839 = vrot.lane.b32.xlu0 %v829, 120
    %v840 = vpop.permute.xlu0 %839
    %841 = vrot.lane.b32.xlu0 %v830, 120
    %v842 = vpop.permute.xlu0 %841
    %v847 = vadd.f32 %v815, %v836
    %v848 = vadd.f32 %v816, %v838
    %v849 = vadd.f32 %v817, %v840
    %v850 = vadd.f32 %v818, %v842
    %v851 = vld [vmem:[#allocation3 + $0x2] sm:$0xff]
    %v852 = vld [vmem:[#allocation3 + $0xa] sm:$0xff]
    %v853 = vld [vmem:[#allocation3 + $0x1a] sm:$0xff]
    %v854 = vld [vmem:[#allocation3 + $0x22] sm:$0xff]
    %v855 = vlaneseq
    %v856 = vshrl.u32 %v855, 7
    %v857 = vsub.s32 6, %v856
    %v858 = vrot.slane %v689, %v857
    %v859 = vmul.f32 %v851, %v858
    %v860 = vmul.f32 %v852, %v858
    %v861 = vmul.f32 %v853, %v858
    %v862 = vmul.f32 %v854, %v858
    %v863 = vadd.f32 %v847, %v859
    %v864 = vadd.f32 %v848, %v860
    %v865 = vadd.f32 %v849, %v861
    %v866 = vadd.f32 %v850, %v862
    %v867 = vlaneseq
    %v868 = vshrl.u32 %v867, 7
    %v869 = vsub.s32 7, %v868
    %v870 = vrot.slane %v689, %v869
    %872 = vrot.lane.b32.xlu0 %v870, 4
    %v873 = vpop.permute.xlu0 %872
    %v875 = vmul.f32 %v851, %v873
    %v876 = vmul.f32 %v852, %v873
    %v877 = vmul.f32 %v853, %v873
    %v878 = vmul.f32 %v854, %v873
    %883 = vrot.lane.b32.xlu0 %v875, 124
    %v884 = vpop.permute.xlu0 %883
    %885 = vrot.lane.b32.xlu0 %v876, 124
    %v886 = vpop.permute.xlu0 %885
    %887 = vrot.lane.b32.xlu0 %v877, 124
    %v888 = vpop.permute.xlu0 %887
    %889 = vrot.lane.b32.xlu0 %v878, 124
    %v890 = vpop.permute.xlu0 %889
    %v895 = vadd.f32 %v863, %v884
    %v896 = vadd.f32 %v864, %v886
    %v897 = vadd.f32 %v865, %v888
    %v898 = vadd.f32 %v866, %v890
    %v899 = vlaneseq
    %v900 = vshrl.u32 %v899, 7
    %v901 = vsub.s32 0, %v900
    %v902 = vrot.slane %v690, %v901
    %904 = vrot.lane.b32.xlu0 %v902, 8
    %v905 = vpop.permute.xlu0 %904
    %v907 = vmul.f32 %v851, %v905
    %v908 = vmul.f32 %v852, %v905
    %v909 = vmul.f32 %v853, %v905
    %v910 = vmul.f32 %v854, %v905
    %915 = vrot.lane.b32.xlu0 %v907, 120
    %v916 = vpop.permute.xlu0 %915
    %917 = vrot.lane.b32.xlu0 %v908, 120
    %v918 = vpop.permute.xlu0 %917
    %919 = vrot.lane.b32.xlu0 %v909, 120
    %v920 = vpop.permute.xlu0 %919
    %921 = vrot.lane.b32.xlu0 %v910, 120
    %v922 = vpop.permute.xlu0 %921
    %v927 = vadd.f32 %v895, %v916
    %v928 = vadd.f32 %v896, %v918
    %v929 = vadd.f32 %v897, %v920
    %v930 = vadd.f32 %v898, %v922
    %v931 = vld [vmem:[#allocation10] sm:$0xff]
    %v932 = vld [vmem:[#allocation10 + $0x8] sm:$0xff]
    %v933 = vld [vmem:[#allocation10 + $0x10] sm:$0xff]
    %v934 = vld [vmem:[#allocation10 + $0x18] sm:$0xff]
    %v935 = vld [vmem:[#allocation10 + $0x20] sm:$0xff]
    %v936 = vld [vmem:[#allocation10 + $0x28] sm:$0xff]
    %v937 = vld [vmem:[#allocation10 + $0x30] sm:$0xff]
    %v938 = vld [vmem:[#allocation10 + $0x38] sm:$0xff]
    %v940 = vsel %vm401, %v927, 0
    %v943 = vsel %vm401, %v928, 0
    %v946 = vsel %vm401, %v929, 0
    %v949 = vsel %vm401, %v930, 0
    %951 = vmatprep.subr.mxu0 0.0
    %952 = vmatpush1.msra.mxu0 %v931
    %953 = vmatprep.subr.mxu0 0.0
    %954 = vmatpush1.msra.mxu0 %v932
    %955 = vmatprep.subr.mxu0 0.0
    %956 = vmatpush1.msra.mxu0 %v933
    %957 = vmatprep.subr.mxu0 0.0
    %958 = vmatpush1.msra.mxu0 %v934
    %959 = vmatprep.subr.mxu0 0.0
    %960 = vmatpush1.msra.mxu0 %v935
    %961 = vmatprep.subr.mxu0 0.0
    %962 = vmatpush1.msra.mxu0 %v936
    %963 = vmatprep.subr.mxu0 0.0
    %964 = vmatpush1.msra.mxu0 %v937
    %965 = vmatprep.subr.mxu0 0.0
    %966 = vmatpush1.msra.mxu0 %v938
    %967 = vmatprep.subr.mxu0 0.0
    %968 = vmatpush1.msra.mxu0 0.0
    %969 = vmatprep.subr.mxu0 0.0
    %970 = vmatpush1.msra.mxu0 0.0
    %971 = vmatprep.subr.mxu0 0.0
    %972 = vmatpush1.msra.mxu0 0.0
    %973 = vmatprep.subr.mxu0 0.0
    %974 = vmatpush1.msra.mxu0 0.0
    %975 = vmatprep.subr.mxu0 0.0
    %976 = vmatpush1.msra.mxu0 0.0
    %977 = vmatprep.subr.mxu0 0.0
    %978 = vmatpush1.msra.mxu0 0.0
    %979 = vmatprep.subr.mxu0 0.0
    %980 = vmatpush1.msra.mxu0 0.0
    %981 = vmatprep.subr.mxu0 0.0
    %982 = vmatpush1.msra.mxu0 0.0
    %983 = vmatprep.subr.mxu0 0.0
    %984 = vmatpush1.msra.mxu0 0.0
    %985 = vmatprep.subr.mxu0 0.0
    %986 = vmatpush1.msra.mxu0 0.0
    %987 = vmatprep.subr.mxu0 0.0
    %988 = vmatpush1.msra.mxu0 0.0
    %989 = vmatprep.subr.mxu0 0.0
    %990 = vmatpush1.msra.mxu0 0.0
    %991 = vmatprep.subr.mxu0 0.0
    %992 = vmatpush1.msra.mxu0 0.0
    %993 = vmatprep.subr.mxu0 0.0
    %994 = vmatpush1.msra.mxu0 0.0
    %995 = vmatprep.subr.mxu0 0.0
    %996 = vmatpush1.msra.mxu0 0.0
    %997 = vmatprep.subr.mxu0 0.0
    %998 = vmatpush1.msra.mxu0 0.0
    %999 = vmatprep.subr.mxu0 0.0
    %1000 = vmatpush1.msra.mxu0 0.0
    %1001 = vmatprep.subr.mxu0 0.0
    %1002 = vmatpush1.msra.mxu0 0.0
    %1003 = vmatprep.subr.mxu0 0.0
    %1004 = vmatpush1.msra.mxu0 0.0
    %1005 = vmatprep.subr.mxu0 0.0
    %1006 = vmatpush1.msra.mxu0 0.0
    %1007 = vmatprep.subr.mxu0 0.0
    %1008 = vmatpush1.msra.mxu0 0.0
    %1009 = vmatprep.subr.mxu0 0.0
    %1010 = vmatpush1.msra.mxu0 0.0
    %1011 = vmatprep.subr.mxu0 0.0
    %1012 = vmatpush1.msra.mxu0 0.0
    %1013 = vmatprep.subr.mxu0 0.0
    %1014 = vmatpush1.msra.mxu0 0.0
    %1015 = vmatprep.mubr.f32.mxu0 0.0
    %1016 = vmatmul.mubr.f32.gmra.mrb[0].mxu0 %v940
    %v1017 = vpop.f32.mrb[0].mxu0
    %v1018 = vadd.f32 0.0, %v1017
    %v1019 = vpop.f32.mrb[0].mxu0
    %1020 = vmatprep.mubr.f32.mxu0 0.0
    %1021 = vmatmul.mubr.f32.gmra.mrb[0].mxu0 %v943
    %v1022 = vpop.f32.mrb[0].mxu0
    %v1023 = vadd.f32 0.0, %v1022
    %v1024 = vpop.f32.mrb[0].mxu0
    %1025 = vmatprep.mubr.f32.mxu0 0.0
    %1026 = vmatmul.mubr.f32.gmra.mrb[0].mxu0 %v946
    %v1027 = vpop.f32.mrb[0].mxu0
    %v1028 = vadd.f32 0.0, %v1027
    %v1029 = vpop.f32.mrb[0].mxu0
    %1030 = vmatprep.mubr.f32.mxu0 0.0
    %1031 = vmatmul.mubr.f32.gmra.mrb[0].mxu0 %v949
    %v1032 = vpop.f32.mrb[0].mxu0
    %v1033 = vadd.f32 0.0, %v1032
    %v1034 = vpop.f32.mrb[0].mxu0
    %1035 = vdwg.mxu0
    %v1036 = vld [vmem:[%s7] sm:$0x1]
    %v1037 = vld [vmem:[%s8] sm:$0x1]
    %v1038 = vadd.f32 %v1018, %v1023
    %v1039 = vadd.f32 %v1038, %v1028
    %v1040 = vadd.f32 %v1039, %v1033
    %v1041 = vrot.slane %v1040, 4
    %v1042 = vadd.f32 %v1040, %v1041
    %v1043 = vrot.slane %v1042, 2
    %v1044 = vadd.f32 %v1042, %v1043
    %v1045 = vrot.slane %v1044, 1
    %v1046 = vadd.f32 %v1044, %v1045
    %v1047 = vmul.f32 %v1018, %v1018
    %v1048 = vmul.f32 %v1023, %v1023
    %v1049 = vmul.f32 %v1028, %v1028
    %v1050 = vmul.f32 %v1033, %v1033
    %v1051 = vadd.f32 %v1047, %v1048
    %v1052 = vadd.f32 %v1051, %v1049
    %v1053 = vadd.f32 %v1052, %v1050
    %v1054 = vrot.slane %v1053, 4
    %v1055 = vadd.f32 %v1053, %v1054
    %v1056 = vrot.slane %v1055, 2
    %v1057 = vadd.f32 %v1055, %v1056
    %v1058 = vrot.slane %v1057, 1
    %v1059 = vadd.f32 %v1057, %v1058
    %1061 = vrot.lane.b32.xlu0 %v1046, 8
    %v1062 = vpop.permute.xlu0 %1061
    %v1064 = vadd.f32 %v1046, %v1062
    %1066 = vrot.lane.b32.xlu0 %v1064, 16
    %v1067 = vpop.permute.xlu0 %1066
    %v1069 = vadd.f32 %v1064, %v1067
    %1071 = vrot.lane.b32.xlu0 %v1069, 32
    %v1072 = vpop.permute.xlu0 %1071
    %v1074 = vadd.f32 %v1069, %v1072
    %1076 = vrot.lane.b32.xlu0 %v1074, 64
    %v1077 = vpop.permute.xlu0 %1076
    %v1079 = vadd.f32 %v1074, %v1077
    %1081 = vrot.lane.b32.xlu0 %v1059, 8
    %v1082 = vpop.permute.xlu0 %1081
    %v1084 = vadd.f32 %v1059, %v1082
    %1086 = vrot.lane.b32.xlu0 %v1084, 16
    %v1087 = vpop.permute.xlu0 %1086
    %v1089 = vadd.f32 %v1084, %v1087
    %1091 = vrot.lane.b32.xlu0 %v1089, 32
    %v1092 = vpop.permute.xlu0 %1091
    %v1094 = vadd.f32 %v1089, %v1092
    %1096 = vrot.lane.b32.xlu0 %v1094, 64
    %v1097 = vpop.permute.xlu0 %1096
    %v1099 = vadd.f32 %v1094, %v1097
    %v1100 = vmul.f32 %v1079, 0.001953125
    %v1101 = vmul.f32 %v1099, 0.001953125
    %v1102 = vmul.f32 %v1100, %v1100
    %v1103 = vsub.f32 %v1101, %v1102
    %v1104 = vadd.f32 %v1103, 1e-05
    %v1105 = vrsqrt.pop %v1104
    %v1106 = vmul.f32 %v1036, %v1105
    %v1107 = vmul.f32 %v1100, %v1106
    %v1108 = vsub.f32 %v1037, %v1107
    %v1110 = vlaneseq
    %v1111 = vshrl.u32 %v1110, 7
    %v1112 = vsub.s32 0, %v1111
    %v1113 = vrot.slane %v1106, %v1112
    %v1115 = vmul.f32 %v1018, %v1113
    %v1116 = vmul.f32 %v1023, %v1113
    %v1117 = vmul.f32 %v1028, %v1113
    %v1118 = vmul.f32 %v1033, %v1113
    %v1120 = vlaneseq
    %v1121 = vshrl.u32 %v1120, 7
    %v1122 = vsub.s32 0, %v1121
    %v1123 = vrot.slane %v1108, %v1122
    %v1125 = vadd.f32 %v1115, %v1123
    %v1126 = vadd.f32 %v1116, %v1123
    %v1127 = vadd.f32 %v1117, %v1123
    %v1128 = vadd.f32 %v1118, %v1123
    %1129 = vst [vmem:[#allocation12] sm:$0xff] %v1125
    %1130 = vst [vmem:[#allocation12 + $0x8] sm:$0xff] %v1126
    %1131 = vst [vmem:[#allocation12 + $0x10] sm:$0xff] %v1127
    %1132 = vst [vmem:[#allocation12 + $0x18] sm:$0xff] %v1128
    // Predicated region
    $region54: #{tpu_custom_call.1} parent=1 // pred_check
      _
    $region55: #{tpu_custom_call.1} parent=1 // pred_check_branch
      %1134 = sbr.rel (0) target = $region57
    $region56: #{tpu_custom_call.1} parent=1 // pred_region
      %s1136 = ssub.s32 512, 512
      %1137 = vsyncadd [#allocation6], %s1136
      %s1138 = sshll.u32 [#allocation12], 4
      %s1139 = int_to_ptr.vmem [resolvable:$true] %s1138
      %1144 = dma.vmem_to_hbm [thread:$0]  %s1139, 512, %s9, [#allocation6], 128, 128, 8
    $region57: #{tpu_custom_call.1} parent=1 // pred_fallthru
      _
    // Predicated region
    $region58: #{tpu_custom_call.1} parent=1 // pred_check
      _
    $region59: #{tpu_custom_call.1} parent=1 // pred_check_branch
      %1146 = sbr.rel (0) target = $region61
    $region60: #{tpu_custom_call.1} parent=1 // pred_region
      %1147 = dma.done [#allocation6], 512
    $region61: #{tpu_custom_call.1} parent=1 // pred_fallthru
      _
    %1148 = vsyncpa [#allocation5], 1
    %1149 = vsyncpa [#allocation8], 1
    %1150 = vsyncpa [#allocation11], 1
    %1151 = vsyncpa [#allocation6], 1

</llo_original>
